<compile_context>
chip_gen: v5e
topology: v5e:2x2
jax: 0.10.0
libtpu: 0.0.40
codegen_flags: <defaults>
</compile_context>

<pallas_src>
import functools

import jax
import jax.numpy as jnp
from jax import lax
from jax.experimental import pallas as pl
from jax.experimental.pallas import tpu as pltpu


def _round_up(a, b):
    return ((a + b - 1) // b) * b


# --------------------------------------------------------------------------------------
# Kernel
# --------------------------------------------------------------------------------------
def make_kernel(filter_sizes, t_real, t_out, nf_pad):
    n_fs = len(filter_sizes)

    def kernel(x_ref, *refs):
        out_ref = refs[-1]
        params = refs[:-1]
        conv_w_refs = params[0:n_fs]            # each [fs, D, NF_PAD]        bf16
        conv_b_refs = params[n_fs:2 * n_fs]     # each [1, NF_PAD]            f32
        fc_w_ref = params[2 * n_fs]             # [n_fs*NF_PAD, OUT_PAD]      f32
        fc_b_ref = params[2 * n_fs + 1]         # [1, OUT_PAD]                f32

        x = x_ref[...]                          # [TB, T_ext, D] bf16 (time zero-padded)
        TB = x.shape[0]
        D = x.shape[2]

        # Position index along the (sublane) time axis; shared by all filter sizes.
        pos = lax.broadcasted_iota(jnp.int32, (t_out, nf_pad), 0)

        pooled = []
        for idx, fs in enumerate(filter_sizes):
            tout = t_real - fs + 1              # number of valid conv positions
            acc = None
            for k in range(fs):
                # Shifted tap; reshape is layout-free because t_out % 8 == 0.
                xk = x[:, k:k + t_out, :].reshape(TB * t_out, D)
                y = jnp.dot(xk, conv_w_refs[idx][k],
                            preferred_element_type=jnp.float32)   # [TB*T_out, NF_PAD]
                acc = y if acc is None else acc + y
            conv = jnp.maximum(acc + conv_b_refs[idx][...], 0.0)  # bias + relu (f32)
            conv = conv.reshape(TB, t_out, nf_pad)                # free (t_out % 8 == 0)
            # Mask padded time positions to 0 (safe: post-ReLU max is always >= 0).
            conv = jnp.where((pos < tout)[None, :, :], conv, 0.0)
            pooled.append(jnp.max(conv, axis=1))                  # [TB, NF_PAD]

        # fc(cat): single GEMM, pooled slabs concatenated at 128-aligned lane offsets.
        cat = jnp.concatenate(pooled, axis=-1)                    # [TB, n_fs*NF_PAD] f32
        out = jnp.dot(cat, fc_w_ref[...], preferred_element_type=jnp.float32)
        out_ref[...] = out + fc_b_ref[...]       # dropout = identity (eval), no activation

    return kernel


# --------------------------------------------------------------------------------------
# Wrapper-side parameter preparation (pure layout plumbing: transpose / split / pad)
# --------------------------------------------------------------------------------------
def prepare_params(conv_ws, conv_bs, fc_w, fc_b, filter_sizes, nf_pad, out_pad):
    """conv_ws[i]: [nf, 1, fs, D] ; conv_bs[i]: [nf] ; fc_w: [out, in] ; fc_b: [out]."""
    n_fs = len(filter_sizes)
    nf = conv_ws[0].shape[0]
    out_dim = fc_w.shape[0]

    flat = []
    # Conv weights as per-tap slabs [fs, D, NF_PAD], bf16.
    for w in conv_ws:
        w3 = jnp.transpose(w[:, 0, :, :], (1, 2, 0))              # [fs, D, nf]
        w3 = jnp.pad(w3, ((0, 0), (0, 0), (0, nf_pad - nf)))
        flat.append(w3.astype(jnp.bfloat16))
    # Conv biases as [1, NF_PAD], f32 (padded channels get zero bias -> stay zero).
    for b in conv_bs:
        bp = jnp.pad(b.reshape(1, -1), ((0, 0), (0, nf_pad - nf)))
        flat.append(bp.astype(jnp.float32))
    # fc weight: [out, in] -> [in, out], split per filter size, pad rows to NF_PAD and
    # lanes to OUT_PAD, stack into one slab -> one fused fc GEMM in-kernel. Kept f32.
    fc_w_t = fc_w.T                                               # [n_fs*nf, out]
    slabs = []
    for i in range(n_fs):
        s = fc_w_t[i * nf:(i + 1) * nf, :]
        slabs.append(jnp.pad(s, ((0, nf_pad - nf), (0, out_pad - out_dim))))
    flat.append(jnp.concatenate(slabs, axis=0).astype(jnp.float32))  # [n_fs*NF_PAD, OUT_PAD]
    # fc bias padded to [1, OUT_PAD], f32.
    flat.append(jnp.pad(fc_b.reshape(1, -1),
                        ((0, 0), (0, out_pad - out_dim))).astype(jnp.float32))
    return flat


def _weight_spec(shape, single_buffer):
    """Grid-invariant weight slab: constant index_map; single-buffered if supported."""
    ndim = len(shape)
    imap = lambda i, _z=(0,) * ndim: _z
    if single_buffer:
        return pl.BlockSpec(shape, imap, pipeline_mode=pl.Buffered(1))
    return pl.BlockSpec(shape, imap)


def _vmem_capacity_bytes():
    try:
        return int(pltpu.get_tpu_info().vmem_capacity_bytes)
    except Exception:
        return 64 * 1024 * 1024   # conservative (v7x per-core VMEM)


def _vmem_bytes(shape, itemsize):
    """Rough resident size of an array in VMEM ((8,128) layout padding included)."""
    shape = tuple(int(s) for s in shape)
    if len(shape) == 0:
        return itemsize
    lanes = _round_up(shape[-1], 128)
    subl = _round_up(shape[-2], 8) if len(shape) >= 2 else 1
    lead = 1
    for s in shape[:-2]:
        lead *= s
    return lead * subl * lanes * itemsize


# --------------------------------------------------------------------------------------
# Forward
# --------------------------------------------------------------------------------------
@functools.partial(jax.jit, static_argnames=("filter_sizes", "single_buffer_weights"))
def forward(pose, conv_ws, conv_bs, fc_w, fc_b, filter_sizes, single_buffer_weights=True):
    B, T, D = pose.shape
    n_fs = len(filter_sizes)
    max_fs = max(filter_sizes)
    nf = conv_ws[0].shape[0]
    out_dim = fc_w.shape[0]

    nf_pad = 128 * pl.cdiv(nf, 128)            # lane-dense conv channels
    out_pad = 128 * pl.cdiv(out_dim, 128)      # lane-dense output
    t_out = _round_up(T, 8)                    # working positions (mult. of 8 -> free reshape)
    t_ext = _round_up(t_out + max_fs - 1, 8)   # padded input length covering all tap shifts

    flat = prepare_params(list(conv_ws), list(conv_bs), fc_w, fc_b,
                          filter_sizes, nf_pad, out_pad)

    # ----- batch tiling: >= 2 grid steps (v7x dual-TC / double-buffering), TB % 8 == 0 -----
    TB = min(128, _round_up(max(1, B // 2), 8))

    # ----- per-generation VMEM budget including in-kernel intermediates -----
    cap = _vmem_capacity_bytes()
    budget = cap * 3 // 4
    w_mult = 1 if single_buffer_weights else 2
    weight_bytes = sum(_vmem_bytes(p.shape, p.dtype.itemsize) for p in flat)

    def footprint(tb):
        x_tile = _vmem_bytes((tb, t_ext, D), 2)
        o_tile = _vmem_bytes((tb, out_pad), 4)
        inter = (_vmem_bytes((tb * t_out, D), 2)              # shifted tap copy (bf16)
                 + 3 * _vmem_bytes((tb * t_out, nf_pad), 4)   # acc + tap product + relu/mask
                 + n_fs * _vmem_bytes((tb, nf_pad), 4)        # pooled slabs
                 + _vmem_bytes((t_out, nf_pad), 4)            # position mask
                 + _vmem_bytes((tb, n_fs * nf_pad), 4))       # concatenated pooled
        return w_mult * weight_bytes + 2 * x_tile + 2 * o_tile + inter

    while TB > 8 and footprint(TB) > budget:
        TB = _round_up(max(8, TB // 2), 8)

    n_steps = max(2, pl.cdiv(B, TB))
    Bp = n_steps * TB
    vmem_limit = int(min(max(footprint(TB) + (2 << 20), 8 << 20), budget))

    # Pad batch (extra rows sliced off) and time (zeros; masked before the pool).
    x = pose.astype(jnp.bfloat16)
    x = jnp.pad(x, ((0, Bp - B), (0, t_ext - T), (0, 0)))

    in_specs = [pl.BlockSpec((TB, t_ext, D), lambda i: (i, 0, 0))]
    in_specs += [_weight_spec(tuple(p.shape), single_buffer_weights) for p in flat]
    out_spec = pl.BlockSpec((TB, out_pad), lambda i: (i, 0))

    out = pl.pallas_call(
        make_kernel(filter_sizes, T, t_out, nf_pad),
        out_shape=jax.ShapeDtypeStruct((Bp, out_pad), jnp.float32),
        grid=(n_steps,),
        in_specs=in_specs,
        out_specs=out_spec,
        compiler_params=pltpu.CompilerParams(
            dimension_semantics=("parallel",),
            vmem_limit_bytes=vmem_limit,
        ),
    )(x, *flat)

    return out[:B, :out_dim]


# --------------------------------------------------------------------------------------
# Pure-JAX reference (f32) mirroring the PyTorch module, for validation
# --------------------------------------------------------------------------------------
def reference_forward(pose, conv_ws, conv_bs, fc_w, fc_b, filter_sizes):
    B, T, D = pose.shape
    pooled = []
    for w, b, fs in zip(conv_ws, conv_bs, filter_sizes):
        tout = T - fs + 1
        acc = jnp.zeros((B, tout, w.shape[0]), jnp.float32)
        for k in range(fs):
            acc = acc + jnp.einsum("btd,fd->btf", pose[:, k:k + tout, :], w[:, 0, k, :])
        conved = jnp.maximum(acc + b[None, None, :], 0.0)
        pooled.append(jnp.max(conved, axis=1))
    cat = jnp.concatenate(pooled, axis=1)            # dropout = identity (eval)
    return cat @ fc_w.T + fc_b[None, :]


# --------------------------------------------------------------------------------------
# Deterministic synthetic parameters (PyTorch-default-style uniform init)
# --------------------------------------------------------------------------------------
def init_params(key, *, input_dim, n_filters, filter_sizes, output_dim):
    keys = iter(jax.random.split(key, 4 * len(filter_sizes) + 4))
    nk = lambda: next(keys)

    conv_ws, conv_bs = [], []
    for fs in filter_sizes:
        bound = 1.0 / ((fs * input_dim) ** 0.5)
        conv_ws.append(jax.random.uniform(nk(), (n_filters, 1, fs, input_dim),
                                          jnp.float32, -bound, bound))
        conv_bs.append(jax.random.uniform(nk(), (n_filters,), jnp.float32, -bound, bound))

    in_f = n_filters * len(filter_sizes)
    bound = 1.0 / (in_f ** 0.5)
    fc_w = jax.random.uniform(nk(), (output_dim, in_f), jnp.float32, -bound, bound)
    fc_b = jax.random.uniform(nk(), (output_dim,), jnp.float32, -bound, bound)
    return conv_ws, conv_bs, fc_w, fc_b


# --------------------------------------------------------------------------------------
if __name__ == "__main__":
    B, T = 2, 8
    INPUT_DIM = 16
    N_FILTERS = 8
    FILTER_SIZES = (2, 3)
    OUTPUT_DIM = 32
    # DROPOUT is identity in eval mode.

    key = jax.random.PRNGKey(0)
    kx, kp = jax.random.split(key)
    pose = jax.random.normal(kx, (B, T, INPUT_DIM), jnp.float32)

    conv_ws, conv_bs, fc_w, fc_b = init_params(
        kp, input_dim=INPUT_DIM, n_filters=N_FILTERS,
        filter_sizes=FILTER_SIZES, output_dim=OUTPUT_DIM)

    try:
        out = forward(pose, tuple(conv_ws), tuple(conv_bs), fc_w, fc_b,
                      FILTER_SIZES, single_buffer_weights=True)
        out = jax.block_until_ready(out)
    except Exception:
        # Installed JAX rejected pl.Buffered(1) single-buffering of the grid-invariant
        # weight slabs; rerun with default (double-buffered) weight BlockSpecs.
        out = forward(pose, tuple(conv_ws), tuple(conv_bs), fc_w, fc_b,
                      FILTER_SIZES, single_buffer_weights=False)
        out = jax.block_until_ready(out)

    assert out.shape == (B, OUTPUT_DIM) and out.dtype == jnp.float32
    assert bool(jnp.all(jnp.isfinite(out)))

    ref = reference_forward(pose, conv_ws, conv_bs, fc_w, fc_b, FILTER_SIZES)
    max_err = float(jnp.max(jnp.abs(out - ref)))
    assert max_err < 1e-1, f"mismatch vs f32 reference: {max_err}"

    print("KERNEL_OK")
</pallas_src>

<mosaic_0001>
module attributes {stable_mosaic.version = 11 : i64} {
  func.func @kernel(%arg0: i32, %arg1: memref<8x16x16xbf16, #tpu.memory_space<vmem>>, %arg2: memref<2x16x128xbf16, #tpu.memory_space<vmem>>, %arg3: memref<3x16x128xbf16, #tpu.memory_space<vmem>>, %arg4: memref<1x128xf32, #tpu.memory_space<vmem>>, %arg5: memref<1x128xf32, #tpu.memory_space<vmem>>, %arg6: memref<256x128xf32, #tpu.memory_space<vmem>>, %arg7: memref<1x128xf32, #tpu.memory_space<vmem>>, %arg8: memref<8x128xf32, #tpu.memory_space<vmem>>) attributes {dimension_semantics = [#tpu.dimension_semantics<parallel>], iteration_bounds = array<i64: 2>, scalar_prefetch = 0 : i64, scratch_operands = 0 : i64, tpu.core_type = #tpu.core_type<tc>, window_params = [{transform_indices = @transform_0, window_bounds = array<i64: 8, 16, 16>}, {pipeline_mode = #tpu.pipeline_mode<synchronous>, transform_indices = @transform_1, window_bounds = array<i64: 2, 16, 128>}, {pipeline_mode = #tpu.pipeline_mode<synchronous>, transform_indices = @transform_2, window_bounds = array<i64: 3, 16, 128>}, {pipeline_mode = #tpu.pipeline_mode<synchronous>, transform_indices = @transform_3, window_bounds = array<i64: 1, 128>}, {pipeline_mode = #tpu.pipeline_mode<synchronous>, transform_indices = @transform_4, window_bounds = array<i64: 1, 128>}, {pipeline_mode = #tpu.pipeline_mode<synchronous>, transform_indices = @transform_5, window_bounds = array<i64: 256, 128>}, {pipeline_mode = #tpu.pipeline_mode<synchronous>, transform_indices = @transform_6, window_bounds = array<i64: 1, 128>}, {transform_indices = @transform_7, window_bounds = array<i64: 8, 128>}]} {
    %c0 = arith.constant 0 : index
    %c0_0 = arith.constant 0 : index
    %c0_1 = arith.constant 0 : index
    %0 = vector.load %arg1[%c0, %c0_0, %c0_1] : memref<8x16x16xbf16, #tpu.memory_space<vmem>>, vector<8x16x16xbf16>
    %1 = tpu.iota {dimensions = array<i32: 0>} : vector<8x128xi32>
    %2 = vector.extract_strided_slice %0 {offsets = [0, 0, 0], sizes = [8, 8, 16], strides = [1, 1, 1]} : vector<8x16x16xbf16> to vector<8x8x16xbf16>
    %3 = vector.shape_cast %2 : vector<8x8x16xbf16> to vector<64x16xbf16>
    %c0_2 = arith.constant 0 : index
    %c0_3 = arith.constant 0 : index
    %c0_4 = arith.constant 0 : index
    %4 = vector.load %arg2[%c0_2, %c0_3, %c0_4] : memref<2x16x128xbf16, #tpu.memory_space<vmem>>, vector<1x16x128xbf16>
    %5 = vector.shape_cast %4 : vector<1x16x128xbf16> to vector<16x128xbf16>
    %cst = arith.constant dense<0.000000e+00> : vector<64x128xf32>
    %6 = tpu.matmul %3, %5, %cst {dimension_numbers = #tpu.dot_dimension_numbers<[1], [0], [0], [1], [0, 0, 1, 1], [], []>} : vector<64x16xbf16>, vector<16x128xbf16>, vector<64x128xf32> -> vector<64x128xf32>
    %7 = vector.extract_strided_slice %0 {offsets = [0, 1, 0], sizes = [8, 8, 16], strides = [1, 1, 1]} : vector<8x16x16xbf16> to vector<8x8x16xbf16>
    %8 = vector.shape_cast %7 : vector<8x8x16xbf16> to vector<64x16xbf16>
    %c1 = arith.constant 1 : index
    %c0_5 = arith.constant 0 : index
    %c0_6 = arith.constant 0 : index
    %9 = vector.load %arg2[%c1, %c0_5, %c0_6] : memref<2x16x128xbf16, #tpu.memory_space<vmem>>, vector<1x16x128xbf16>
    %10 = vector.shape_cast %9 : vector<1x16x128xbf16> to vector<16x128xbf16>
    %cst_7 = arith.constant dense<0.000000e+00> : vector<64x128xf32>
    %11 = tpu.matmul %8, %10, %cst_7 {dimension_numbers = #tpu.dot_dimension_numbers<[1], [0], [0], [1], [0, 0, 1, 1], [], []>} : vector<64x16xbf16>, vector<16x128xbf16>, vector<64x128xf32> -> vector<64x128xf32>
    %12 = arith.addf %6, %11 : vector<64x128xf32>
    %c0_8 = arith.constant 0 : index
    %c0_9 = arith.constant 0 : index
    %13 = vector.load %arg4[%c0_8, %c0_9] : memref<1x128xf32, #tpu.memory_space<vmem>>, vector<1x128xf32>
    %14 = vector.broadcast %13 : vector<1x128xf32> to vector<64x128xf32>
    %15 = arith.addf %12, %14 : vector<64x128xf32>
    %cst_10 = arith.constant 0.000000e+00 : f32
    %16 = vector.broadcast %cst_10 : f32 to vector<64x128xf32>
    %17 = arith.maximumf %15, %16 : vector<64x128xf32>
    %18 = vector.shape_cast %17 : vector<64x128xf32> to vector<8x8x128xf32>
    %c7_i32 = arith.constant 7 : i32
    %19 = vector.broadcast %c7_i32 : i32 to vector<8x128xi32>
    %20 = arith.cmpi slt, %1, %19 : vector<8x128xi32>
    %21 = vector.shape_cast %20 : vector<8x128xi1> to vector<1x8x128xi1>
    %cst_11 = arith.constant 0.000000e+00 : f32
    %22 = vector.shape_cast %21 : vector<1x8x128xi1> to vector<1x8x128xi1>
    %23 = vector.broadcast %22 : vector<1x8x128xi1> to vector<8x8x128xi1>
    %24 = vector.broadcast %cst_11 : f32 to vector<8x8x128xf32>
    %25 = arith.select %23, %18, %24 : vector<8x8x128xi1>, vector<8x8x128xf32>
    %cst_12 = arith.constant dense<0xFF800000> : vector<8x128xf32>
    %26 = vector.multi_reduction <maximumf>, %25, %cst_12 [1] : vector<8x8x128xf32> to vector<8x128xf32>
    %27 = vector.extract_strided_slice %0 {offsets = [0, 0, 0], sizes = [8, 8, 16], strides = [1, 1, 1]} : vector<8x16x16xbf16> to vector<8x8x16xbf16>
    %28 = vector.shape_cast %27 : vector<8x8x16xbf16> to vector<64x16xbf16>
    %c0_13 = arith.constant 0 : index
    %c0_14 = arith.constant 0 : index
    %c0_15 = arith.constant 0 : index
    %29 = vector.load %arg3[%c0_13, %c0_14, %c0_15] : memref<3x16x128xbf16, #tpu.memory_space<vmem>>, vector<1x16x128xbf16>
    %30 = vector.shape_cast %29 : vector<1x16x128xbf16> to vector<16x128xbf16>
    %cst_16 = arith.constant dense<0.000000e+00> : vector<64x128xf32>
    %31 = tpu.matmul %28, %30, %cst_16 {dimension_numbers = #tpu.dot_dimension_numbers<[1], [0], [0], [1], [0, 0, 1, 1], [], []>} : vector<64x16xbf16>, vector<16x128xbf16>, vector<64x128xf32> -> vector<64x128xf32>
    %32 = vector.extract_strided_slice %0 {offsets = [0, 1, 0], sizes = [8, 8, 16], strides = [1, 1, 1]} : vector<8x16x16xbf16> to vector<8x8x16xbf16>
    %33 = vector.shape_cast %32 : vector<8x8x16xbf16> to vector<64x16xbf16>
    %c1_17 = arith.constant 1 : index
    %c0_18 = arith.constant 0 : index
    %c0_19 = arith.constant 0 : index
    %34 = vector.load %arg3[%c1_17, %c0_18, %c0_19] : memref<3x16x128xbf16, #tpu.memory_space<vmem>>, vector<1x16x128xbf16>
    %35 = vector.shape_cast %34 : vector<1x16x128xbf16> to vector<16x128xbf16>
    %cst_20 = arith.constant dense<0.000000e+00> : vector<64x128xf32>
    %36 = tpu.matmul %33, %35, %cst_20 {dimension_numbers = #tpu.dot_dimension_numbers<[1], [0], [0], [1], [0, 0, 1, 1], [], []>} : vector<64x16xbf16>, vector<16x128xbf16>, vector<64x128xf32> -> vector<64x128xf32>
    %37 = arith.addf %31, %36 : vector<64x128xf32>
    %38 = vector.extract_strided_slice %0 {offsets = [0, 2, 0], sizes = [8, 8, 16], strides = [1, 1, 1]} : vector<8x16x16xbf16> to vector<8x8x16xbf16>
    %39 = vector.shape_cast %38 : vector<8x8x16xbf16> to vector<64x16xbf16>
    %c2 = arith.constant 2 : index
    %c0_21 = arith.constant 0 : index
    %c0_22 = arith.constant 0 : index
    %40 = vector.load %arg3[%c2, %c0_21, %c0_22] : memref<3x16x128xbf16, #tpu.memory_space<vmem>>, vector<1x16x128xbf16>
    %41 = vector.shape_cast %40 : vector<1x16x128xbf16> to vector<16x128xbf16>
    %cst_23 = arith.constant dense<0.000000e+00> : vector<64x128xf32>
    %42 = tpu.matmul %39, %41, %cst_23 {dimension_numbers = #tpu.dot_dimension_numbers<[1], [0], [0], [1], [0, 0, 1, 1], [], []>} : vector<64x16xbf16>, vector<16x128xbf16>, vector<64x128xf32> -> vector<64x128xf32>
    %43 = arith.addf %37, %42 : vector<64x128xf32>
    %c0_24 = arith.constant 0 : index
    %c0_25 = arith.constant 0 : index
    %44 = vector.load %arg5[%c0_24, %c0_25] : memref<1x128xf32, #tpu.memory_space<vmem>>, vector<1x128xf32>
    %45 = vector.broadcast %44 : vector<1x128xf32> to vector<64x128xf32>
    %46 = arith.addf %43, %45 : vector<64x128xf32>
    %cst_26 = arith.constant 0.000000e+00 : f32
    %47 = vector.broadcast %cst_26 : f32 to vector<64x128xf32>
    %48 = arith.maximumf %46, %47 : vector<64x128xf32>
    %49 = vector.shape_cast %48 : vector<64x128xf32> to vector<8x8x128xf32>
    %c6_i32 = arith.constant 6 : i32
    %50 = vector.broadcast %c6_i32 : i32 to vector<8x128xi32>
    %51 = arith.cmpi slt, %1, %50 : vector<8x128xi32>
    %52 = vector.shape_cast %51 : vector<8x128xi1> to vector<1x8x128xi1>
    %cst_27 = arith.constant 0.000000e+00 : f32
    %53 = vector.shape_cast %52 : vector<1x8x128xi1> to vector<1x8x128xi1>
    %54 = vector.broadcast %53 : vector<1x8x128xi1> to vector<8x8x128xi1>
    %55 = vector.broadcast %cst_27 : f32 to vector<8x8x128xf32>
    %56 = arith.select %54, %49, %55 : vector<8x8x128xi1>, vector<8x8x128xf32>
    %cst_28 = arith.constant dense<0xFF800000> : vector<8x128xf32>
    %57 = vector.multi_reduction <maximumf>, %56, %cst_28 [1] : vector<8x8x128xf32> to vector<8x128xf32>
    %58 = tpu.concatenate %26, %57 in 1 : vector<8x128xf32>, vector<8x128xf32> -> vector<8x256xf32>
    %c0_29 = arith.constant 0 : index
    %c0_30 = arith.constant 0 : index
    %59 = vector.load %arg6[%c0_29, %c0_30] : memref<256x128xf32, #tpu.memory_space<vmem>>, vector<256x128xf32>
    %cst_31 = arith.constant dense<0.000000e+00> : vector<8x128xf32>
    %60 = tpu.matmul %58, %59, %cst_31 {dimension_numbers = #tpu.dot_dimension_numbers<[1], [0], [0], [1], [0, 0, 1, 1], [], []>} : vector<8x256xf32>, vector<256x128xf32>, vector<8x128xf32> -> vector<8x128xf32>
    %c0_32 = arith.constant 0 : index
    %c0_33 = arith.constant 0 : index
    %61 = vector.load %arg7[%c0_32, %c0_33] : memref<1x128xf32, #tpu.memory_space<vmem>>, vector<1x128xf32>
    %62 = vector.broadcast %61 : vector<1x128xf32> to vector<8x128xf32>
    %63 = arith.addf %60, %62 : vector<8x128xf32>
    %c0_34 = arith.constant 0 : index
    %c0_35 = arith.constant 0 : index
    %64 = vector.load %arg8[%c0_34, %c0_35] : memref<8x128xf32, #tpu.memory_space<vmem>>, vector<8x128xf32>
    tpu.vector_store %arg8[%c0_34, %c0_35], %63 {strides = array<i32>} : memref<8x128xf32, #tpu.memory_space<vmem>>, vector<8x128xf32>,
    return
  }
  func.func @transform_0(%arg0: i32) -> (i32, i32, i32) {
    %c0_i32 = arith.constant 0 : i32
    %c0_i32_0 = arith.constant 0 : i32
    %c0_i32_1 = arith.constant 0 : i32
    return %arg0, %c0_i32, %c0_i32_0 : i32, i32, i32
  }
  func.func @transform_1(%arg0: i32) -> (i32, i32, i32) {
    %c0_i32 = arith.constant 0 : i32
    %c0_i32_0 = arith.constant 0 : i32
    %c0_i32_1 = arith.constant 0 : i32
    %c0_i32_2 = arith.constant 0 : i32
    return %c0_i32, %c0_i32_0, %c0_i32_1 : i32, i32, i32
  }
  func.func @transform_2(%arg0: i32) -> (i32, i32, i32) {
    %c0_i32 = arith.constant 0 : i32
    %c0_i32_0 = arith.constant 0 : i32
    %c0_i32_1 = arith.constant 0 : i32
    %c0_i32_2 = arith.constant 0 : i32
    return %c0_i32, %c0_i32_0, %c0_i32_1 : i32, i32, i32
  }
  func.func @transform_3(%arg0: i32) -> (i32, i32) {
    %c0_i32 = arith.constant 0 : i32
    %c0_i32_0 = arith.constant 0 : i32
    %c0_i32_1 = arith.constant 0 : i32
    return %c0_i32, %c0_i32_0 : i32, i32
  }
  func.func @transform_4(%arg0: i32) -> (i32, i32) {
    %c0_i32 = arith.constant 0 : i32
    %c0_i32_0 = arith.constant 0 : i32
    %c0_i32_1 = arith.constant 0 : i32
    return %c0_i32, %c0_i32_0 : i32, i32
  }
  func.func @transform_5(%arg0: i32) -> (i32, i32) {
    %c0_i32 = arith.constant 0 : i32
    %c0_i32_0 = arith.constant 0 : i32
    %c0_i32_1 = arith.constant 0 : i32
    return %c0_i32, %c0_i32_0 : i32, i32
  }
  func.func @transform_6(%arg0: i32) -> (i32, i32) {
    %c0_i32 = arith.constant 0 : i32
    %c0_i32_0 = arith.constant 0 : i32
    %c0_i32_1 = arith.constant 0 : i32
    return %c0_i32, %c0_i32_0 : i32, i32
  }
  func.func @transform_7(%arg0: i32) -> (i32, i32) {
    %c0_i32 = arith.constant 0 : i32
    %c0_i32_0 = arith.constant 0 : i32
    return %arg0, %c0_i32 : i32, i32
  }
}

module attributes {stable_mosaic.version = 11 : i64} {
  func.func @kernel(%arg0: i32, %arg1: memref<8x16x16xbf16, #tpu.memory_space<vmem>>, %arg2: memref<2x16x128xbf16, #tpu.memory_space<vmem>>, %arg3: memref<3x16x128xbf16, #tpu.memory_space<vmem>>, %arg4: memref<1x128xf32, #tpu.memory_space<vmem>>, %arg5: memref<1x128xf32, #tpu.memory_space<vmem>>, %arg6: memref<256x128xf32, #tpu.memory_space<vmem>>, %arg7: memref<1x128xf32, #tpu.memory_space<vmem>>, %arg8: memref<8x128xf32, #tpu.memory_space<vmem>>) attributes {dimension_semantics = [#tpu.dimension_semantics<parallel>], iteration_bounds = array<i64: 2>, scalar_prefetch = 0 : i64, scratch_operands = 0 : i64, tpu.core_type = #tpu.core_type<tc>, window_params = [{transform_indices = @transform_0, window_bounds = array<i64: 8, 16, 16>}, {pipeline_mode = #tpu.pipeline_mode<synchronous>, transform_indices = @transform_1, window_bounds = array<i64: 2, 16, 128>}, {pipeline_mode = #tpu.pipeline_mode<synchronous>, transform_indices = @transform_2, window_bounds = array<i64: 3, 16, 128>}, {pipeline_mode = #tpu.pipeline_mode<synchronous>, transform_indices = @transform_3, window_bounds = array<i64: 1, 128>}, {pipeline_mode = #tpu.pipeline_mode<synchronous>, transform_indices = @transform_4, window_bounds = array<i64: 1, 128>}, {pipeline_mode = #tpu.pipeline_mode<synchronous>, transform_indices = @transform_5, window_bounds = array<i64: 256, 128>}, {pipeline_mode = #tpu.pipeline_mode<synchronous>, transform_indices = @transform_6, window_bounds = array<i64: 1, 128>}, {transform_indices = @transform_7, window_bounds = array<i64: 8, 128>}]} {
    %c0 = arith.constant 0 : index
    %c0_0 = arith.constant 0 : index
    %c0_1 = arith.constant 0 : index
    %0 = vector.load %arg1[%c0, %c0_0, %c0_1] : memref<8x16x16xbf16, #tpu.memory_space<vmem>>, vector<8x16x16xbf16>
    %1 = tpu.iota {dimensions = array<i32: 0>} : vector<8x128xi32>
    %2 = vector.extract_strided_slice %0 {offsets = [0, 0, 0], sizes = [8, 8, 16], strides = [1, 1, 1]} : vector<8x16x16xbf16> to vector<8x8x16xbf16>
    %3 = vector.shape_cast %2 : vector<8x8x16xbf16> to vector<64x16xbf16>
    %c0_2 = arith.constant 0 : index
    %c0_3 = arith.constant 0 : index
    %c0_4 = arith.constant 0 : index
    %4 = vector.load %arg2[%c0_2, %c0_3, %c0_4] : memref<2x16x128xbf16, #tpu.memory_space<vmem>>, vector<1x16x128xbf16>
    %5 = vector.shape_cast %4 : vector<1x16x128xbf16> to vector<16x128xbf16>
    %cst = arith.constant dense<0.000000e+00> : vector<64x128xf32>
    %6 = tpu.matmul %3, %5, %cst {dimension_numbers = #tpu.dot_dimension_numbers<[1], [0], [0], [1], [0, 0, 1, 1], [], []>} : vector<64x16xbf16>, vector<16x128xbf16>, vector<64x128xf32> -> vector<64x128xf32>
    %7 = vector.extract_strided_slice %0 {offsets = [0, 1, 0], sizes = [8, 8, 16], strides = [1, 1, 1]} : vector<8x16x16xbf16> to vector<8x8x16xbf16>
    %8 = vector.shape_cast %7 : vector<8x8x16xbf16> to vector<64x16xbf16>
    %c1 = arith.constant 1 : index
    %c0_5 = arith.constant 0 : index
    %c0_6 = arith.constant 0 : index
    %9 = vector.load %arg2[%c1, %c0_5, %c0_6] : memref<2x16x128xbf16, #tpu.memory_space<vmem>>, vector<1x16x128xbf16>
    %10 = vector.shape_cast %9 : vector<1x16x128xbf16> to vector<16x128xbf16>
    %cst_7 = arith.constant dense<0.000000e+00> : vector<64x128xf32>
    %11 = tpu.matmul %8, %10, %cst_7 {dimension_numbers = #tpu.dot_dimension_numbers<[1], [0], [0], [1], [0, 0, 1, 1], [], []>} : vector<64x16xbf16>, vector<16x128xbf16>, vector<64x128xf32> -> vector<64x128xf32>
    %12 = arith.addf %6, %11 : vector<64x128xf32>
    %c0_8 = arith.constant 0 : index
    %c0_9 = arith.constant 0 : index
    %13 = vector.load %arg4[%c0_8, %c0_9] : memref<1x128xf32, #tpu.memory_space<vmem>>, vector<1x128xf32>
    %14 = vector.broadcast %13 : vector<1x128xf32> to vector<64x128xf32>
    %15 = arith.addf %12, %14 : vector<64x128xf32>
    %cst_10 = arith.constant 0.000000e+00 : f32
    %16 = vector.broadcast %cst_10 : f32 to vector<64x128xf32>
    %17 = arith.maximumf %15, %16 : vector<64x128xf32>
    %18 = vector.shape_cast %17 : vector<64x128xf32> to vector<8x8x128xf32>
    %c7_i32 = arith.constant 7 : i32
    %19 = vector.broadcast %c7_i32 : i32 to vector<8x128xi32>
    %20 = arith.cmpi slt, %1, %19 : vector<8x128xi32>
    %21 = vector.shape_cast %20 : vector<8x128xi1> to vector<1x8x128xi1>
    %cst_11 = arith.constant 0.000000e+00 : f32
    %22 = vector.shape_cast %21 : vector<1x8x128xi1> to vector<1x8x128xi1>
    %23 = vector.broadcast %22 : vector<1x8x128xi1> to vector<8x8x128xi1>
    %24 = vector.broadcast %cst_11 : f32 to vector<8x8x128xf32>
    %25 = arith.select %23, %18, %24 : vector<8x8x128xi1>, vector<8x8x128xf32>
    %cst_12 = arith.constant dense<0xFF800000> : vector<8x128xf32>
    %26 = vector.multi_reduction <maximumf>, %25, %cst_12 [1] : vector<8x8x128xf32> to vector<8x128xf32>
    %27 = vector.extract_strided_slice %0 {offsets = [0, 0, 0], sizes = [8, 8, 16], strides = [1, 1, 1]} : vector<8x16x16xbf16> to vector<8x8x16xbf16>
    %28 = vector.shape_cast %27 : vector<8x8x16xbf16> to vector<64x16xbf16>
    %c0_13 = arith.constant 0 : index
    %c0_14 = arith.constant 0 : index
    %c0_15 = arith.constant 0 : index
    %29 = vector.load %arg3[%c0_13, %c0_14, %c0_15] : memref<3x16x128xbf16, #tpu.memory_space<vmem>>, vector<1x16x128xbf16>
    %30 = vector.shape_cast %29 : vector<1x16x128xbf16> to vector<16x128xbf16>
    %cst_16 = arith.constant dense<0.000000e+00> : vector<64x128xf32>
    %31 = tpu.matmul %28, %30, %cst_16 {dimension_numbers = #tpu.dot_dimension_numbers<[1], [0], [0], [1], [0, 0, 1, 1], [], []>} : vector<64x16xbf16>, vector<16x128xbf16>, vector<64x128xf32> -> vector<64x128xf32>
    %32 = vector.extract_strided_slice %0 {offsets = [0, 1, 0], sizes = [8, 8, 16], strides = [1, 1, 1]} : vector<8x16x16xbf16> to vector<8x8x16xbf16>
    %33 = vector.shape_cast %32 : vector<8x8x16xbf16> to vector<64x16xbf16>
    %c1_17 = arith.constant 1 : index
    %c0_18 = arith.constant 0 : index
    %c0_19 = arith.constant 0 : index
    %34 = vector.load %arg3[%c1_17, %c0_18, %c0_19] : memref<3x16x128xbf16, #tpu.memory_space<vmem>>, vector<1x16x128xbf16>
    %35 = vector.shape_cast %34 : vector<1x16x128xbf16> to vector<16x128xbf16>
    %cst_20 = arith.constant dense<0.000000e+00> : vector<64x128xf32>
    %36 = tpu.matmul %33, %35, %cst_20 {dimension_numbers = #tpu.dot_dimension_numbers<[1], [0], [0], [1], [0, 0, 1, 1], [], []>} : vector<64x16xbf16>, vector<16x128xbf16>, vector<64x128xf32> -> vector<64x128xf32>
    %37 = arith.addf %31, %36 : vector<64x128xf32>
    %38 = vector.extract_strided_slice %0 {offsets = [0, 2, 0], sizes = [8, 8, 16], strides = [1, 1, 1]} : vector<8x16x16xbf16> to vector<8x8x16xbf16>
    %39 = vector.shape_cast %38 : vector<8x8x16xbf16> to vector<64x16xbf16>
    %c2 = arith.constant 2 : index
    %c0_21 = arith.constant 0 : index
    %c0_22 = arith.constant 0 : index
    %40 = vector.load %arg3[%c2, %c0_21, %c0_22] : memref<3x16x128xbf16, #tpu.memory_space<vmem>>, vector<1x16x128xbf16>
    %41 = vector.shape_cast %40 : vector<1x16x128xbf16> to vector<16x128xbf16>
    %cst_23 = arith.constant dense<0.000000e+00> : vector<64x128xf32>
    %42 = tpu.matmul %39, %41, %cst_23 {dimension_numbers = #tpu.dot_dimension_numbers<[1], [0], [0], [1], [0, 0, 1, 1], [], []>} : vector<64x16xbf16>, vector<16x128xbf16>, vector<64x128xf32> -> vector<64x128xf32>
    %43 = arith.addf %37, %42 : vector<64x128xf32>
    %c0_24 = arith.constant 0 : index
    %c0_25 = arith.constant 0 : index
    %44 = vector.load %arg5[%c0_24, %c0_25] : memref<1x128xf32, #tpu.memory_space<vmem>>, vector<1x128xf32>
    %45 = vector.broadcast %44 : vector<1x128xf32> to vector<64x128xf32>
    %46 = arith.addf %43, %45 : vector<64x128xf32>
    %cst_26 = arith.constant 0.000000e+00 : f32
    %47 = vector.broadcast %cst_26 : f32 to vector<64x128xf32>
    %48 = arith.maximumf %46, %47 : vector<64x128xf32>
    %49 = vector.shape_cast %48 : vector<64x128xf32> to vector<8x8x128xf32>
    %c6_i32 = arith.constant 6 : i32
    %50 = vector.broadcast %c6_i32 : i32 to vector<8x128xi32>
    %51 = arith.cmpi slt, %1, %50 : vector<8x128xi32>
    %52 = vector.shape_cast %51 : vector<8x128xi1> to vector<1x8x128xi1>
    %cst_27 = arith.constant 0.000000e+00 : f32
    %53 = vector.shape_cast %52 : vector<1x8x128xi1> to vector<1x8x128xi1>
    %54 = vector.broadcast %53 : vector<1x8x128xi1> to vector<8x8x128xi1>
    %55 = vector.broadcast %cst_27 : f32 to vector<8x8x128xf32>
    %56 = arith.select %54, %49, %55 : vector<8x8x128xi1>, vector<8x8x128xf32>
    %cst_28 = arith.constant dense<0xFF800000> : vector<8x128xf32>
    %57 = vector.multi_reduction <maximumf>, %56, %cst_28 [1] : vector<8x8x128xf32> to vector<8x128xf32>
    %58 = tpu.concatenate %26, %57 in 1 : vector<8x128xf32>, vector<8x128xf32> -> vector<8x256xf32>
    %c0_29 = arith.constant 0 : index
    %c0_30 = arith.constant 0 : index
    %59 = vector.load %arg6[%c0_29, %c0_30] : memref<256x128xf32, #tpu.memory_space<vmem>>, vector<256x128xf32>
    %cst_31 = arith.constant dense<0.000000e+00> : vector<8x128xf32>
    %60 = tpu.matmul %58, %59, %cst_31 {dimension_numbers = #tpu.dot_dimension_numbers<[1], [0], [0], [1], [0, 0, 1, 1], [], []>} : vector<8x256xf32>, vector<256x128xf32>, vector<8x128xf32> -> vector<8x128xf32>
    %c0_32 = arith.constant 0 : index
    %c0_33 = arith.constant 0 : index
    %61 = vector.load %arg7[%c0_32, %c0_33] : memref<1x128xf32, #tpu.memory_space<vmem>>, vector<1x128xf32>
    %62 = vector.broadcast %61 : vector<1x128xf32> to vector<8x128xf32>
    %63 = arith.addf %60, %62 : vector<8x128xf32>
    %c0_34 = arith.constant 0 : index
    %c0_35 = arith.constant 0 : index
    %64 = vector.load %arg8[%c0_34, %c0_35] : memref<8x128xf32, #tpu.memory_space<vmem>>, vector<8x128xf32>
    tpu.vector_store %arg8[%c0_34, %c0_35], %63 {strides = array<i32>} : memref<8x128xf32, #tpu.memory_space<vmem>>, vector<8x128xf32>,
    return
  }
  func.func @transform_0(%arg0: i32) -> (i32, i32, i32) {
    %c0_i32 = arith.constant 0 : i32
    %c0_i32_0 = arith.constant 0 : i32
    %c0_i32_1 = arith.constant 0 : i32
    return %arg0, %c0_i32, %c0_i32_0 : i32, i32, i32
  }
  func.func @transform_1(%arg0: i32) -> (i32, i32, i32) {
    %c0_i32 = arith.constant 0 : i32
    %c0_i32_0 = arith.constant 0 : i32
    %c0_i32_1 = arith.constant 0 : i32
    %c0_i32_2 = arith.constant 0 : i32
    return %c0_i32, %c0_i32_0, %c0_i32_1 : i32, i32, i32
  }
  func.func @transform_2(%arg0: i32) -> (i32, i32, i32) {
    %c0_i32 = arith.constant 0 : i32
    %c0_i32_0 = arith.constant 0 : i32
    %c0_i32_1 = arith.constant 0 : i32
    %c0_i32_2 = arith.constant 0 : i32
    return %c0_i32, %c0_i32_0, %c0_i32_1 : i32, i32, i32
  }
  func.func @transform_3(%arg0: i32) -> (i32, i32) {
    %c0_i32 = arith.constant 0 : i32
    %c0_i32_0 = arith.constant 0 : i32
    %c0_i32_1 = arith.constant 0 : i32
    return %c0_i32, %c0_i32_0 : i32, i32
  }
  func.func @transform_4(%arg0: i32) -> (i32, i32) {
    %c0_i32 = arith.constant 0 : i32
    %c0_i32_0 = arith.constant 0 : i32
    %c0_i32_1 = arith.constant 0 : i32
    return %c0_i32, %c0_i32_0 : i32, i32
  }
  func.func @transform_5(%arg0: i32) -> (i32, i32) {
    %c0_i32 = arith.constant 0 : i32
    %c0_i32_0 = arith.constant 0 : i32
    %c0_i32_1 = arith.constant 0 : i32
    return %c0_i32, %c0_i32_0 : i32, i32
  }
  func.func @transform_6(%arg0: i32) -> (i32, i32) {
    %c0_i32 = arith.constant 0 : i32
    %c0_i32_0 = arith.constant 0 : i32
    %c0_i32_1 = arith.constant 0 : i32
    return %c0_i32, %c0_i32_0 : i32, i32
  }
  func.func @transform_7(%arg0: i32) -> (i32, i32) {
    %c0_i32 = arith.constant 0 : i32
    %c0_i32_0 = arith.constant 0 : i32
    return %arg0, %c0_i32 : i32, i32
  }
}

</mosaic_0001>

<llo_original>
// kernel: forward.1
$region0: #{forward.1}
  #allocation0 [shape = 'u32[]', space=smem, size = 0x4, offset = 0x4, fixed_abs, tag = 'smem constant byte address 0x4 - core index']
  #allocation1 [shape = 'u32[72,128]{1,0:T(1,128)}', space=vmem, size = 0x9000, scoped, tag = 'internal scratch']
  %s0 = inlined_call_operand.vmem [shape: bf16[16,16,16], index: 0, kind: input, shape index: {}]
  %s1 = inlined_call_operand.vmem [shape: bf16[2,16,128], index: 1, kind: input, shape index: {}]
  %s2 = inlined_call_operand.vmem [shape: bf16[3,16,128], index: 2, kind: input, shape index: {}]
  %s3 = inlined_call_operand.vmem [shape: f32[1,128], index: 3, kind: input, shape index: {}]
  %s4 = inlined_call_operand.vmem [shape: f32[1,128], index: 4, kind: input, shape index: {}]
  %s5 = inlined_call_operand.vmem [shape: f32[256,128], index: 5, kind: input, shape index: {}]
  %s6 = inlined_call_operand.vmem [shape: f32[1,128], index: 6, kind: input, shape index: {}]
  %s7 = inlined_call_operand.vmem [shape: f32[16,128], index: 7, kind: output, shape index: {}]
  %s8 = sld [smem:[#allocation0]]
  $region61: #{forward.1} parent=0
    _
  %s10 = ssub.s32 1, %s8
  %s11 = scalar_select 0, %s10, %s8
  loop: start=0, step=1, limit=4
  $region2: #{forward.1} parent=0 // loop_pre_header
    _
  $region3: #{forward.1} parent=0 // loop_header
    %s13 = sphi 0, %s17
    %p14 = scmp.ge.s32.totalorder %s13, 4
    %s23 = sphi 0, %s25
    %s26 = sphi 0, %s23
    %s27 = sphi 0, %s26
    %s43 = sphi 0, %s27
    %s47 = sphi 0, %s47
    %s49 = sphi 0, %s47
    %s50 = sphi 0, %s49
    %s64 = sphi 0, %s50
    %s68 = sphi 0, %s68
    %s70 = sphi 0, %s68
    %s71 = sphi 0, %s70
    %s85 = sphi 0, %s71
    %s89 = sphi 0, %s89
    %s91 = sphi 0, %s89
    %s92 = sphi 0, %s91
    %s106 = sphi 0, %s92
    %s110 = sphi 0, %s110
    %s112 = sphi 0, %s110
    %s113 = sphi 0, %s112
    %s127 = sphi 0, %s113
    %s131 = sphi 0, %s131
    %s133 = sphi 0, %s131
    %s134 = sphi 0, %s133
    %s148 = sphi 0, %s134
    %s152 = sphi 0, %s152
    %s154 = sphi 0, %s152
    %s155 = sphi 0, %s154
    %s169 = sphi 0, %s155
    %s175 = sphi 0, %s177
    %s178 = sphi 0, %s175
    %s179 = sphi 0, %s178
    %s195 = sphi 0, %s179
  $region4: #{forward.1} parent=0 // loop_header_branch
    %16 = sbr.rel (%p14) target = $region8
  $region5: #{forward.1} parent=0 // loop_body
    %s18 = ssub.s32 %s13, 1
    %s19 = ssub.s32 %s13, 2
    %s20 = sadd.s32 %s13, 1
    %s21 = ssub.s32 %s13, %s20
    %p22 = scmp.eq.s32.totalorder %s21, 0
    %s24 = sadd.s32 %s23, 1
    %s25 = scalar_select %p22, %s23, %s24
    %p28 = pneg %p22
    %p29 = scmp.eq.s32.totalorder %s13, 1
    %p30 = por %p28, %p29
    %p31 = scmp.ne.s32.totalorder %s23, %s26
    %p32 = scmp.eq.s32.totalorder %s13, 0
    %p33 = por %p31, %p32
    %p34 = scmp.ne.s32.totalorder %s23, %s26
    %p35 = scmp.eq.s32.totalorder %s18, 1
    %p36 = por %p34, %p35
    %p37 = scmp.ne.s32.totalorder %s26, %s27
    %p38 = scmp.eq.s32.totalorder %s18, 0
    %p39 = por %p37, %p38
    %p40 = scmp.ne.s32.totalorder %s26, %s27
    %p41 = scmp.eq.s32.totalorder %s19, 1
    %p42 = por %p40, %p41
    %p44 = scmp.ne.s32.totalorder %s27, %s43
    %p45 = scmp.eq.s32.totalorder %s19, 0
    %p46 = por %p44, %p45
    %s48 = sadd.s32 %s47, 1
    %p51 = scmp.eq.s32.totalorder %s13, 1
    %p52 = scmp.ne.s32.totalorder %s47, %s49
    %p53 = scmp.eq.s32.totalorder %s13, 0
    %p54 = por %p52, %p53
    %p55 = scmp.ne.s32.totalorder %s47, %s49
    %p56 = scmp.eq.s32.totalorder %s18, 1
    %p57 = por %p55, %p56
    %p58 = scmp.ne.s32.totalorder %s49, %s50
    %p59 = scmp.eq.s32.totalorder %s18, 0
    %p60 = por %p58, %p59
    %p61 = scmp.ne.s32.totalorder %s49, %s50
    %p62 = scmp.eq.s32.totalorder %s19, 1
    %p63 = por %p61, %p62
    %p65 = scmp.ne.s32.totalorder %s50, %s64
    %p66 = scmp.eq.s32.totalorder %s19, 0
    %p67 = por %p65, %p66
    %s69 = sadd.s32 %s68, 1
    %p72 = scmp.eq.s32.totalorder %s13, 1
    %p73 = scmp.ne.s32.totalorder %s68, %s70
    %p74 = scmp.eq.s32.totalorder %s13, 0
    %p75 = por %p73, %p74
    %p76 = scmp.ne.s32.totalorder %s68, %s70
    %p77 = scmp.eq.s32.totalorder %s18, 1
    %p78 = por %p76, %p77
    %p79 = scmp.ne.s32.totalorder %s70, %s71
    %p80 = scmp.eq.s32.totalorder %s18, 0
    %p81 = por %p79, %p80
    %p82 = scmp.ne.s32.totalorder %s70, %s71
    %p83 = scmp.eq.s32.totalorder %s19, 1
    %p84 = por %p82, %p83
    %p86 = scmp.ne.s32.totalorder %s71, %s85
    %p87 = scmp.eq.s32.totalorder %s19, 0
    %p88 = por %p86, %p87
    %s90 = sadd.s32 %s89, 1
    %p93 = scmp.eq.s32.totalorder %s13, 1
    %p94 = scmp.ne.s32.totalorder %s89, %s91
    %p95 = scmp.eq.s32.totalorder %s13, 0
    %p96 = por %p94, %p95
    %p97 = scmp.ne.s32.totalorder %s89, %s91
    %p98 = scmp.eq.s32.totalorder %s18, 1
    %p99 = por %p97, %p98
    %p100 = scmp.ne.s32.totalorder %s91, %s92
    %p101 = scmp.eq.s32.totalorder %s18, 0
    %p102 = por %p100, %p101
    %p103 = scmp.ne.s32.totalorder %s91, %s92
    %p104 = scmp.eq.s32.totalorder %s19, 1
    %p105 = por %p103, %p104
    %p107 = scmp.ne.s32.totalorder %s92, %s106
    %p108 = scmp.eq.s32.totalorder %s19, 0
    %p109 = por %p107, %p108
    %s111 = sadd.s32 %s110, 1
    %p114 = scmp.eq.s32.totalorder %s13, 1
    %p115 = scmp.ne.s32.totalorder %s110, %s112
    %p116 = scmp.eq.s32.totalorder %s13, 0
    %p117 = por %p115, %p116
    %p118 = scmp.ne.s32.totalorder %s110, %s112
    %p119 = scmp.eq.s32.totalorder %s18, 1
    %p120 = por %p118, %p119
    %p121 = scmp.ne.s32.totalorder %s112, %s113
    %p122 = scmp.eq.s32.totalorder %s18, 0
    %p123 = por %p121, %p122
    %p124 = scmp.ne.s32.totalorder %s112, %s113
    %p125 = scmp.eq.s32.totalorder %s19, 1
    %p126 = por %p124, %p125
    %p128 = scmp.ne.s32.totalorder %s113, %s127
    %p129 = scmp.eq.s32.totalorder %s19, 0
    %p130 = por %p128, %p129
    %s132 = sadd.s32 %s131, 1
    %p135 = scmp.eq.s32.totalorder %s13, 1
    %p136 = scmp.ne.s32.totalorder %s131, %s133
    %p137 = scmp.eq.s32.totalorder %s13, 0
    %p138 = por %p136, %p137
    %p139 = scmp.ne.s32.totalorder %s131, %s133
    %p140 = scmp.eq.s32.totalorder %s18, 1
    %p141 = por %p139, %p140
    %p142 = scmp.ne.s32.totalorder %s133, %s134
    %p143 = scmp.eq.s32.totalorder %s18, 0
    %p144 = por %p142, %p143
    %p145 = scmp.ne.s32.totalorder %s133, %s134
    %p146 = scmp.eq.s32.totalorder %s19, 1
    %p147 = por %p145, %p146
    %p149 = scmp.ne.s32.totalorder %s134, %s148
    %p150 = scmp.eq.s32.totalorder %s19, 0
    %p151 = por %p149, %p150
    %s153 = sadd.s32 %s152, 1
    %p156 = scmp.eq.s32.totalorder %s13, 1
    %p157 = scmp.ne.s32.totalorder %s152, %s154
    %p158 = scmp.eq.s32.totalorder %s13, 0
    %p159 = por %p157, %p158
    %p160 = scmp.ne.s32.totalorder %s152, %s154
    %p161 = scmp.eq.s32.totalorder %s18, 1
    %p162 = por %p160, %p161
    %p163 = scmp.ne.s32.totalorder %s154, %s155
    %p164 = scmp.eq.s32.totalorder %s18, 0
    %p165 = por %p163, %p164
    %p166 = scmp.ne.s32.totalorder %s154, %s155
    %p167 = scmp.eq.s32.totalorder %s19, 1
    %p168 = por %p166, %p167
    %p170 = scmp.ne.s32.totalorder %s155, %s169
    %p171 = scmp.eq.s32.totalorder %s19, 0
    %p172 = por %p170, %p171
    %s173 = ssub.s32 %s13, %s20
    %p174 = scmp.eq.s32.totalorder %s173, 0
    %s176 = sadd.s32 %s175, 1
    %s177 = scalar_select %p174, %s175, %s176
    %p180 = pneg %p174
    %p181 = scmp.eq.s32.totalorder %s13, 1
    %p182 = por %p180, %p181
    %p183 = scmp.ne.s32.totalorder %s175, %s178
    %p184 = scmp.eq.s32.totalorder %s13, 0
    %p185 = por %p183, %p184
    %p186 = scmp.ne.s32.totalorder %s175, %s178
    %p187 = scmp.eq.s32.totalorder %s18, 1
    %p188 = por %p186, %p187
    %p189 = scmp.ne.s32.totalorder %s178, %s179
    %p190 = scmp.eq.s32.totalorder %s18, 0
    %p191 = por %p189, %p190
    %p192 = scmp.ne.s32.totalorder %s178, %s179
    %p193 = scmp.eq.s32.totalorder %s19, 1
    %p194 = por %p192, %p193
    %p196 = scmp.ne.s32.totalorder %s179, %s195
    %p197 = scmp.eq.s32.totalorder %s19, 0
    %p198 = por %p196, %p197
    %p199 = scmp.le.s32.totalorder 1, %s13
    %p200 = scmp.lt.s32.totalorder %s13, 3
    %p201 = pnand %p199, %p200
    %p202 = pneg %p201
    // Predicated region
    $region9: #{forward.1} parent=5 // pred_check
      _
    $region10: #{forward.1} parent=5 // pred_check_branch
      %204 = sbr.rel (%p201) target = $region12
    $region11: #{forward.1} parent=5 // pred_region
      %s205 = ssub.s32 %s13, 1
      // Predicated region
      $region13: #{forward.1} parent=11 // pred_check
        %p206 = pneg %p60
      $region14: #{forward.1} parent=11 // pred_check_branch
        %208 = sbr.rel (%p206) target = $region16
      $region15: #{forward.1} parent=11 // pred_region
        _
      $region16: #{forward.1} parent=11 // pred_fallthru
        _
      // Predicated region
      $region17: #{forward.1} parent=11 // pred_check
        %p209 = pneg %p81
      $region18: #{forward.1} parent=11 // pred_check_branch
        %211 = sbr.rel (%p209) target = $region20
      $region19: #{forward.1} parent=11 // pred_region
        _
      $region20: #{forward.1} parent=11 // pred_fallthru
        _
      // Predicated region
      $region21: #{forward.1} parent=11 // pred_check
        %p212 = pneg %p102
      $region22: #{forward.1} parent=11 // pred_check_branch
        %214 = sbr.rel (%p212) target = $region24
      $region23: #{forward.1} parent=11 // pred_region
        _
      $region24: #{forward.1} parent=11 // pred_fallthru
        _
      // Predicated region
      $region25: #{forward.1} parent=11 // pred_check
        %p215 = pneg %p123
      $region26: #{forward.1} parent=11 // pred_check_branch
        %217 = sbr.rel (%p215) target = $region28
      $region27: #{forward.1} parent=11 // pred_region
        _
      $region28: #{forward.1} parent=11 // pred_fallthru
        _
      // Predicated region
      $region29: #{forward.1} parent=11 // pred_check
        %p218 = pneg %p144
      $region30: #{forward.1} parent=11 // pred_check_branch
        %220 = sbr.rel (%p218) target = $region32
      $region31: #{forward.1} parent=11 // pred_region
        _
      $region32: #{forward.1} parent=11 // pred_fallthru
        _
      // Predicated region
      $region33: #{forward.1} parent=11 // pred_check
        %p221 = pneg %p165
      $region34: #{forward.1} parent=11 // pred_check_branch
        %223 = sbr.rel (%p221) target = $region36
      $region35: #{forward.1} parent=11 // pred_region
        _
      $region36: #{forward.1} parent=11 // pred_fallthru
        _
    $region12: #{forward.1} parent=5 // pred_fallthru
      _
    %p224 = scmp.lt.s32.totalorder %s13, 2
    // Predicated region
    $region37: #{forward.1} parent=5 // pred_check
      %p225 = pneg %p224
    $region38: #{forward.1} parent=5 // pred_check_branch
      %227 = sbr.rel (%p225) target = $region40
    $region39: #{forward.1} parent=5 // pred_region
      // Predicated region
      $region41: #{forward.1} parent=39 // pred_check
        %p228 = pneg %p33
      $region42: #{forward.1} parent=39 // pred_check_branch
        %230 = sbr.rel (%p228) target = $region44
      $region43: #{forward.1} parent=39 // pred_region
        %s231 = smul.u32 8, %s13
        %p232 = scmp.lt.s32.totalorder %s231, 15
        %s233 = scalar_select %p232, %s231, 15
        %s234 = smul.addr %s233, 2
        %s235 = smul.addr %s234, 4
        %s236 = scalar_lea.vmem %s0, %s235
        %s237 = smul.u32 8, %s13
      $region44: #{forward.1} parent=39 // pred_fallthru
        _
    $region40: #{forward.1} parent=5 // pred_fallthru
      _
    %p238 = scmp.le.s32.totalorder 1, %s13
    %p239 = scmp.lt.s32.totalorder %s13, 3
    %p240 = pnand %p238, %p239
    %p241 = pneg %p240
    // Predicated region
    $region45: #{forward.1} parent=5 // pred_check
      _
    $region46: #{forward.1} parent=5 // pred_check_branch
      %243 = sbr.rel (%p240) target = $region48
    $region47: #{forward.1} parent=5 // pred_region
      %s244 = ssub.s32 %s13, 1
      %s245 = smul.u32 8, %s18
      %p246 = scmp.lt.s32.totalorder %s245, 15
      %s247 = scalar_select %p246, %s245, 15
      %s248 = smul.addr %s247, 2
      %s249 = smul.addr %s248, 4
      %s250 = scalar_lea.vmem %s0, %s249
      %p251 = pneg %p39
      %p252 = pneg %p36
      %p253 = pneg %p60
      %p254 = pneg %p57
      %p255 = pneg %p81
      %p256 = pneg %p78
      %p257 = pneg %p102
      %p258 = pneg %p99
      %p259 = pneg %p123
      %p260 = pneg %p120
      %p261 = pneg %p144
      %p262 = pneg %p141
      %p263 = pneg %p165
      %p264 = pneg %p162
      %p265 = pneg %p191
      %p266 = pneg %p188
      %p267 = scmp.lt.s32.totalorder %s18, 1
      %s268 = scalar_select %p267, %s18, 1
      %s269 = smul.addr %s268, 8
      %s270 = scalar_lea.vmem %s7, %s269
      %s271 = smul.u32 8, %s18
      %p272 = scmp.lt.s32.totalorder %s271, 15
      %s273 = scalar_select %p272, %s271, 15
      %s274 = smul.addr %s273, 2
      %s275 = smul.addr %s274, 4
      %s276 = scalar_lea.vmem %s0, %s275
      %s277 = smul.u32 8, %s18
      %p278 = scmp.lt.s32.totalorder %s18, 1
      %s279 = scalar_select %p278, %s18, 1
      %s280 = smul.addr %s279, 8
      %s281 = scalar_lea.vmem %s7, %s280
      %v283 = vld [vmem:[%s276] sm:$0xf]
      %v284 = vld [vmem:[%s276 + $0x4] sm:$0xf]
      %v285 = vld [vmem:[%s276 + $0x8] sm:$0xf]
      %v286 = vld [vmem:[%s276 + $0xc] sm:$0xf]
      %v287 = vld [vmem:[%s276 + $0x10] sm:$0xf]
      %v288 = vld [vmem:[%s276 + $0x14] sm:$0xf]
      %v289 = vld [vmem:[%s276 + $0x18] sm:$0xf]
      %v290 = vld [vmem:[%s276 + $0x1c] sm:$0xf]
      %v291 = vld [vmem:[%s276 + $0x20] sm:$0xf]
      %v292 = vld [vmem:[%s276 + $0x24] sm:$0xf]
      %v293 = vld [vmem:[%s276 + $0x28] sm:$0xf]
      %v294 = vld [vmem:[%s276 + $0x2c] sm:$0xf]
      %v295 = vld [vmem:[%s276 + $0x30] sm:$0xf]
      %v296 = vld [vmem:[%s276 + $0x34] sm:$0xf]
      %v297 = vld [vmem:[%s276 + $0x38] sm:$0xf]
      %v298 = vld [vmem:[%s276 + $0x3c] sm:$0xf]
      %v299 = vlaneseq
      %v300 = vshrl.u32 %v299, 7
      %v301 = vld [vmem:[%s1] sm:$0xf]
      %v302 = vld [vmem:[%s1 + $0x4] sm:$0xf]
      %vm303 = vsmask.f32 3328
      %vm304 = vsmask.f32 7440
      %vm305 = vmor %vm303, %vm304
      %v307 = vshrl.u32 %v283, 16
      %v309 = vrot.slane %v307, 4
      %v310 = vshll.u32 %v283, 16
      %v312 = vrot.slane %v310, 5
      %v313 = vor.u32 %v309, %v312
      %v314 = vrot.slane %v313, 4
      %v316 = vshll.u32 %v284, 16
      %v318 = vrot.slane %v316, 5
      %v319 = vsel %vm305, %v314, %v318
      %v321 = vshrl.u32 %v285, 16
      %v323 = vrot.slane %v321, 4
      %v324 = vshll.u32 %v285, 16
      %v326 = vrot.slane %v324, 5
      %v327 = vor.u32 %v323, %v326
      %v328 = vrot.slane %v327, 4
      %v330 = vshll.u32 %v286, 16
      %v332 = vrot.slane %v330, 5
      %v333 = vsel %vm305, %v328, %v332
      %v335 = vshrl.u32 %v287, 16
      %v337 = vrot.slane %v335, 4
      %v338 = vshll.u32 %v287, 16
      %v340 = vrot.slane %v338, 5
      %v341 = vor.u32 %v337, %v340
      %v342 = vrot.slane %v341, 4
      %v344 = vshll.u32 %v288, 16
      %v346 = vrot.slane %v344, 5
      %v347 = vsel %vm305, %v342, %v346
      %v349 = vshrl.u32 %v289, 16
      %v351 = vrot.slane %v349, 4
      %v352 = vshll.u32 %v289, 16
      %v354 = vrot.slane %v352, 5
      %v355 = vor.u32 %v351, %v354
      %v356 = vrot.slane %v355, 4
      %v358 = vshll.u32 %v290, 16
      %v360 = vrot.slane %v358, 5
      %v361 = vsel %vm305, %v356, %v360
      %v363 = vshrl.u32 %v291, 16
      %v365 = vrot.slane %v363, 4
      %v366 = vshll.u32 %v291, 16
      %v368 = vrot.slane %v366, 5
      %v369 = vor.u32 %v365, %v368
      %v370 = vrot.slane %v369, 4
      %v372 = vshll.u32 %v292, 16
      %v374 = vrot.slane %v372, 5
      %v375 = vsel %vm305, %v370, %v374
      %v377 = vshrl.u32 %v293, 16
      %v379 = vrot.slane %v377, 4
      %v380 = vshll.u32 %v293, 16
      %v382 = vrot.slane %v380, 5
      %v383 = vor.u32 %v379, %v382
      %v384 = vrot.slane %v383, 4
      %v386 = vshll.u32 %v294, 16
      %v388 = vrot.slane %v386, 5
      %v389 = vsel %vm305, %v384, %v388
      %v391 = vshrl.u32 %v295, 16
      %v393 = vrot.slane %v391, 4
      %v394 = vshll.u32 %v295, 16
      %v396 = vrot.slane %v394, 5
      %v397 = vor.u32 %v393, %v396
      %v398 = vrot.slane %v397, 4
      %v400 = vshll.u32 %v296, 16
      %v402 = vrot.slane %v400, 5
      %v403 = vsel %vm305, %v398, %v402
      %v405 = vshrl.u32 %v297, 16
      %v407 = vrot.slane %v405, 4
      %v408 = vshll.u32 %v297, 16
      %v410 = vrot.slane %v408, 5
      %v411 = vor.u32 %v407, %v410
      %v412 = vrot.slane %v411, 4
      %v414 = vshll.u32 %v298, 16
      %v416 = vrot.slane %v414, 5
      %v417 = vsel %vm305, %v412, %v416
      %s418 = scalar_lea.vmem %s1, 8
      %v419 = vld [vmem:[%s418] sm:$0xf]
      %v420 = vld [vmem:[%s418 + $0x4] sm:$0xf]
      %v421 = vunpack.c.l.b16 %v319
      %v422 = vunpack.c.l.b16 %v333
      %v423 = vunpack.c.l.b16 %v347
      %v424 = vunpack.c.l.b16 %v361
      %v425 = vunpack.c.l.b16 %v375
      %v426 = vunpack.c.l.b16 %v389
      %v427 = vunpack.c.l.b16 %v403
      %v428 = vunpack.c.l.b16 %v417
      %v429 = vpack.c.b16 %v422, %v421
      %v430 = vpack.c.b16 %v424, %v423
      %v431 = vpack.c.b16 %v426, %v425
      %v432 = vpack.c.b16 %v428, %v427
      %v435 = vunpack.c.l.b16 %v419
      %v436 = vunpack.c.l.b16 %v420
      %v437 = vpack.c.b16 %v436, %v435
      %vm439 = vcmask 130048
      %v441 = vsel %vm439, %v429, 0
      %v444 = vsel %vm439, %v430, 0
      %v447 = vsel %vm439, %v431, 0
      %v450 = vsel %vm439, %v432, 0
      %452 = vmatpush.bf16.msra.mxu0 0
      %453 = vmatpush.bf16.msra.mxu0 0
      %454 = vmatpush.bf16.msra.mxu0 0
      %455 = vmatpush.bf16.msra.mxu0 0
      %456 = vmatpush.bf16.msra.mxu0 0
      %457 = vmatpush.bf16.msra.mxu0 0
      %458 = vmatpush.bf16.msra.mxu0 0
      %459 = vmatpush.bf16.msra.mxu0 %v437
      %460 = vmatmul.bf16.gmra.mxu0 %v441
      %v461 = vpop.f32.mrf.mxu0
      %v462 = vadd.f32 0.0, %v461
      %v463 = vpop.f32.mrf.mxu0
      %v464 = vadd.f32 0.0, %v463
      %465 = vmatmul.bf16.gmra.mxu0 %v444
      %v466 = vpop.f32.mrf.mxu0
      %v467 = vadd.f32 0.0, %v466
      %v468 = vpop.f32.mrf.mxu0
      %v469 = vadd.f32 0.0, %v468
      %470 = vmatmul.bf16.gmra.mxu0 %v447
      %v471 = vpop.f32.mrf.mxu0
      %v472 = vadd.f32 0.0, %v471
      %v473 = vpop.f32.mrf.mxu0
      %v474 = vadd.f32 0.0, %v473
      %475 = vmatmul.bf16.gmra.mxu0 %v450
      %v476 = vpop.f32.mrf.mxu0
      %v477 = vadd.f32 0.0, %v476
      %v478 = vpop.f32.mrf.mxu0
      %v479 = vadd.f32 0.0, %v478
      %480 = vdwg.mxu0
      %v489 = vunpack.c.l.b16 %v283
      %v490 = vunpack.c.l.b16 %v285
      %v491 = vunpack.c.l.b16 %v287
      %v492 = vunpack.c.l.b16 %v289
      %v493 = vunpack.c.l.b16 %v291
      %v494 = vunpack.c.l.b16 %v293
      %v495 = vunpack.c.l.b16 %v295
      %v496 = vunpack.c.l.b16 %v297
      %v497 = vpack.c.b16 %v490, %v489
      %v498 = vpack.c.b16 %v492, %v491
      %v499 = vpack.c.b16 %v494, %v493
      %v500 = vpack.c.b16 %v496, %v495
      %v503 = vunpack.c.l.b16 %v301
      %v504 = vunpack.c.l.b16 %v302
      %v505 = vpack.c.b16 %v504, %v503
      %v508 = vsel %vm439, %v497, 0
      %v511 = vsel %vm439, %v498, 0
      %v514 = vsel %vm439, %v499, 0
      %v517 = vsel %vm439, %v500, 0
      %519 = vmatpush.bf16.msra.mxu0 0
      %520 = vmatpush.bf16.msra.mxu0 0
      %521 = vmatpush.bf16.msra.mxu0 0
      %522 = vmatpush.bf16.msra.mxu0 0
      %523 = vmatpush.bf16.msra.mxu0 0
      %524 = vmatpush.bf16.msra.mxu0 0
      %525 = vmatpush.bf16.msra.mxu0 0
      %526 = vmatpush.bf16.msra.mxu0 %v505
      %527 = vmatmul.bf16.gmra.mxu0 %v508
      %v528 = vpop.f32.mrf.mxu0
      %v529 = vadd.f32 %v462, %v528
      %v530 = vpop.f32.mrf.mxu0
      %v531 = vadd.f32 %v464, %v530
      %532 = vmatmul.bf16.gmra.mxu0 %v511
      %v533 = vpop.f32.mrf.mxu0
      %v534 = vadd.f32 %v467, %v533
      %v535 = vpop.f32.mrf.mxu0
      %v536 = vadd.f32 %v469, %v535
      %537 = vmatmul.bf16.gmra.mxu0 %v514
      %v538 = vpop.f32.mrf.mxu0
      %v539 = vadd.f32 %v472, %v538
      %v540 = vpop.f32.mrf.mxu0
      %v541 = vadd.f32 %v474, %v540
      %542 = vmatmul.bf16.gmra.mxu0 %v517
      %v543 = vpop.f32.mrf.mxu0
      %v544 = vadd.f32 %v477, %v543
      %v545 = vpop.f32.mrf.mxu0
      %v546 = vadd.f32 %v479, %v545
      %547 = vdwg.mxu0
      %v548 = vld [vmem:[%s3] sm:$0x1]
      %v550 = vperm.slane %v548, 0
      %v552 = vadd.f32 %v529, %v550
      %v553 = vadd.f32 %v531, %v550
      %v554 = vadd.f32 %v534, %v550
      %v555 = vadd.f32 %v536, %v550
      %v556 = vadd.f32 %v539, %v550
      %v557 = vadd.f32 %v541, %v550
      %v558 = vadd.f32 %v544, %v550
      %v559 = vadd.f32 %v546, %v550
      %v560 = vmax.f32 %v552, 0.0
      %v561 = vmax.f32 %v553, 0.0
      %v562 = vmax.f32 %v554, 0.0
      %v563 = vmax.f32 %v555, 0.0
      %v564 = vmax.f32 %v556, 0.0
      %v565 = vmax.f32 %v557, 0.0
      %v566 = vmax.f32 %v558, 0.0
      %v567 = vmax.f32 %v559, 0.0
      %vm568 = vcmp.lt.s32.totalorder %v300, 7
      %v569 = vsel %vm568, 1, 0
      %vm570 = vcmp.eq.s32.totalorder %v569, 1
      %v571 = vsel %vm570, %v560, 0.0
      %v572 = vsel %vm570, %v561, 0.0
      %v573 = vsel %vm570, %v562, 0.0
      %v574 = vsel %vm570, %v563, 0.0
      %v575 = vsel %vm570, %v564, 0.0
      %v576 = vsel %vm570, %v565, 0.0
      %v577 = vsel %vm570, %v566, 0.0
      %v578 = vsel %vm570, %v567, 0.0
      %v579 = vrot.slane %v571, 4
      %v580 = vmax.f32 %v571, %v579
      %v581 = vrot.slane %v580, 2
      %v582 = vmax.f32 %v580, %v581
      %v583 = vrot.slane %v582, 1
      %v584 = vmax.f32 %v582, %v583
      %v585 = vrot.slane %v572, 4
      %v586 = vmax.f32 %v572, %v585
      %v587 = vrot.slane %v586, 2
      %v588 = vmax.f32 %v586, %v587
      %v589 = vrot.slane %v588, 1
      %v590 = vmax.f32 %v588, %v589
      %v591 = vrot.slane %v573, 4
      %v592 = vmax.f32 %v573, %v591
      %v593 = vrot.slane %v592, 2
      %v594 = vmax.f32 %v592, %v593
      %v595 = vrot.slane %v594, 1
      %v596 = vmax.f32 %v594, %v595
      %v597 = vrot.slane %v574, 4
      %v598 = vmax.f32 %v574, %v597
      %v599 = vrot.slane %v598, 2
      %v600 = vmax.f32 %v598, %v599
      %v601 = vrot.slane %v600, 1
      %v602 = vmax.f32 %v600, %v601
      %v603 = vrot.slane %v575, 4
      %v604 = vmax.f32 %v575, %v603
      %v605 = vrot.slane %v604, 2
      %v606 = vmax.f32 %v604, %v605
      %v607 = vrot.slane %v606, 1
      %v608 = vmax.f32 %v606, %v607
      %v609 = vrot.slane %v576, 4
      %v610 = vmax.f32 %v576, %v609
      %v611 = vrot.slane %v610, 2
      %v612 = vmax.f32 %v610, %v611
      %v613 = vrot.slane %v612, 1
      %v614 = vmax.f32 %v612, %v613
      %v615 = vrot.slane %v577, 4
      %v616 = vmax.f32 %v577, %v615
      %v617 = vrot.slane %v616, 2
      %v618 = vmax.f32 %v616, %v617
      %v619 = vrot.slane %v618, 1
      %v620 = vmax.f32 %v618, %v619
      %v621 = vrot.slane %v578, 4
      %v622 = vmax.f32 %v578, %v621
      %v623 = vrot.slane %v622, 2
      %v624 = vmax.f32 %v622, %v623
      %v625 = vrot.slane %v624, 1
      %v626 = vmax.f32 %v624, %v625
      %v627 = vld [vmem:[%s2] sm:$0xf]
      %v628 = vld [vmem:[%s2 + $0x4] sm:$0xf]
      %s629 = scalar_lea.vmem %s2, 8
      %v630 = vld [vmem:[%s629] sm:$0xf]
      %v631 = vld [vmem:[%s629 + $0x4] sm:$0xf]
      %v634 = vunpack.c.l.b16 %v630
      %v635 = vunpack.c.l.b16 %v631
      %v636 = vpack.c.b16 %v635, %v634
      %638 = vmatpush.bf16.msra.mxu0 0
      %639 = vmatpush.bf16.msra.mxu0 0
      %640 = vmatpush.bf16.msra.mxu0 0
      %641 = vmatpush.bf16.msra.mxu0 0
      %642 = vmatpush.bf16.msra.mxu0 0
      %643 = vmatpush.bf16.msra.mxu0 0
      %644 = vmatpush.bf16.msra.mxu0 0
      %645 = vmatpush.bf16.msra.mxu0 %v636
      %646 = vmatmul.bf16.gmra.mxu0 %v441
      %v647 = vpop.f32.mrf.mxu0
      %v648 = vadd.f32 0.0, %v647
      %v649 = vpop.f32.mrf.mxu0
      %v650 = vadd.f32 0.0, %v649
      %651 = vmatmul.bf16.gmra.mxu0 %v444
      %v652 = vpop.f32.mrf.mxu0
      %v653 = vadd.f32 0.0, %v652
      %v654 = vpop.f32.mrf.mxu0
      %v655 = vadd.f32 0.0, %v654
      %656 = vmatmul.bf16.gmra.mxu0 %v447
      %v657 = vpop.f32.mrf.mxu0
      %v658 = vadd.f32 0.0, %v657
      %v659 = vpop.f32.mrf.mxu0
      %v660 = vadd.f32 0.0, %v659
      %661 = vmatmul.bf16.gmra.mxu0 %v450
      %v662 = vpop.f32.mrf.mxu0
      %v663 = vadd.f32 0.0, %v662
      %v664 = vpop.f32.mrf.mxu0
      %v665 = vadd.f32 0.0, %v664
      %666 = vdwg.mxu0
      %v669 = vunpack.c.l.b16 %v627
      %v670 = vunpack.c.l.b16 %v628
      %v671 = vpack.c.b16 %v670, %v669
      %673 = vmatpush.bf16.msra.mxu0 0
      %674 = vmatpush.bf16.msra.mxu0 0
      %675 = vmatpush.bf16.msra.mxu0 0
      %676 = vmatpush.bf16.msra.mxu0 0
      %677 = vmatpush.bf16.msra.mxu0 0
      %678 = vmatpush.bf16.msra.mxu0 0
      %679 = vmatpush.bf16.msra.mxu0 0
      %680 = vmatpush.bf16.msra.mxu0 %v671
      %681 = vmatmul.bf16.gmra.mxu0 %v508
      %v682 = vpop.f32.mrf.mxu0
      %v683 = vadd.f32 %v648, %v682
      %v684 = vpop.f32.mrf.mxu0
      %v685 = vadd.f32 %v650, %v684
      %686 = vmatmul.bf16.gmra.mxu0 %v511
      %v687 = vpop.f32.mrf.mxu0
      %v688 = vadd.f32 %v653, %v687
      %v689 = vpop.f32.mrf.mxu0
      %v690 = vadd.f32 %v655, %v689
      %691 = vmatmul.bf16.gmra.mxu0 %v514
      %v692 = vpop.f32.mrf.mxu0
      %v693 = vadd.f32 %v658, %v692
      %v694 = vpop.f32.mrf.mxu0
      %v695 = vadd.f32 %v660, %v694
      %696 = vmatmul.bf16.gmra.mxu0 %v517
      %v697 = vpop.f32.mrf.mxu0
      %v698 = vadd.f32 %v663, %v697
      %v699 = vpop.f32.mrf.mxu0
      %v700 = vadd.f32 %v665, %v699
      %701 = vdwg.mxu0
      %vm710 = vcmask 1042432
      %vm711 = vcmask 1046532
      %vm712 = vmor %vm710, %vm711
      %v713 = vrot.slane %v283, 5
      %v714 = vrot.slane %v713, 4
      %v715 = vrot.slane %v284, 5
      %v716 = vsel %vm712, %v714, %v715
      %v717 = vrot.slane %v285, 5
      %v718 = vrot.slane %v717, 4
      %v719 = vrot.slane %v286, 5
      %v720 = vsel %vm712, %v718, %v719
      %v721 = vrot.slane %v287, 5
      %v722 = vrot.slane %v721, 4
      %v723 = vrot.slane %v288, 5
      %v724 = vsel %vm712, %v722, %v723
      %v725 = vrot.slane %v289, 5
      %v726 = vrot.slane %v725, 4
      %v727 = vrot.slane %v290, 5
      %v728 = vsel %vm712, %v726, %v727
      %v729 = vrot.slane %v291, 5
      %v730 = vrot.slane %v729, 4
      %v731 = vrot.slane %v292, 5
      %v732 = vsel %vm712, %v730, %v731
      %v733 = vrot.slane %v293, 5
      %v734 = vrot.slane %v733, 4
      %v735 = vrot.slane %v294, 5
      %v736 = vsel %vm712, %v734, %v735
      %v737 = vrot.slane %v295, 5
      %v738 = vrot.slane %v737, 4
      %v739 = vrot.slane %v296, 5
      %v740 = vsel %vm712, %v738, %v739
      %v741 = vrot.slane %v297, 5
      %v742 = vrot.slane %v741, 4
      %v743 = vrot.slane %v298, 5
      %v744 = vsel %vm712, %v742, %v743
      %s745 = scalar_lea.vmem %s2, 16
      %v746 = vld [vmem:[%s745] sm:$0xf]
      %v747 = vld [vmem:[%s745 + $0x4] sm:$0xf]
      %v748 = vunpack.c.l.b16 %v716
      %v749 = vunpack.c.l.b16 %v720
      %v750 = vunpack.c.l.b16 %v724
      %v751 = vunpack.c.l.b16 %v728
      %v752 = vunpack.c.l.b16 %v732
      %v753 = vunpack.c.l.b16 %v736
      %v754 = vunpack.c.l.b16 %v740
      %v755 = vunpack.c.l.b16 %v744
      %v756 = vpack.c.b16 %v749, %v748
      %v757 = vpack.c.b16 %v751, %v750
      %v758 = vpack.c.b16 %v753, %v752
      %v759 = vpack.c.b16 %v755, %v754
      %v762 = vunpack.c.l.b16 %v746
      %v763 = vunpack.c.l.b16 %v747
      %v764 = vpack.c.b16 %v763, %v762
      %v767 = vsel %vm439, %v756, 0
      %v770 = vsel %vm439, %v757, 0
      %v773 = vsel %vm439, %v758, 0
      %v776 = vsel %vm439, %v759, 0
      %778 = vmatpush.bf16.msra.mxu0 0
      %779 = vmatpush.bf16.msra.mxu0 0
      %780 = vmatpush.bf16.msra.mxu0 0
      %781 = vmatpush.bf16.msra.mxu0 0
      %782 = vmatpush.bf16.msra.mxu0 0
      %783 = vmatpush.bf16.msra.mxu0 0
      %784 = vmatpush.bf16.msra.mxu0 0
      %785 = vmatpush.bf16.msra.mxu0 %v764
      %786 = vmatmul.bf16.gmra.mxu0 %v767
      %v787 = vpop.f32.mrf.mxu0
      %v788 = vadd.f32 0.0, %v787
      %v789 = vpop.f32.mrf.mxu0
      %v790 = vadd.f32 0.0, %v789
      %791 = vmatmul.bf16.gmra.mxu0 %v770
      %v792 = vpop.f32.mrf.mxu0
      %v793 = vadd.f32 0.0, %v792
      %v794 = vpop.f32.mrf.mxu0
      %v795 = vadd.f32 0.0, %v794
      %796 = vmatmul.bf16.gmra.mxu0 %v773
      %v797 = vpop.f32.mrf.mxu0
      %v798 = vadd.f32 0.0, %v797
      %v799 = vpop.f32.mrf.mxu0
      %v800 = vadd.f32 0.0, %v799
      %801 = vmatmul.bf16.gmra.mxu0 %v776
      %v802 = vpop.f32.mrf.mxu0
      %v803 = vadd.f32 0.0, %v802
      %v804 = vpop.f32.mrf.mxu0
      %v805 = vadd.f32 0.0, %v804
      %806 = vdwg.mxu0
      %v807 = vadd.f32 %v683, %v788
      %v808 = vadd.f32 %v685, %v790
      %v809 = vadd.f32 %v688, %v793
      %v810 = vadd.f32 %v690, %v795
      %v811 = vadd.f32 %v693, %v798
      %v812 = vadd.f32 %v695, %v800
      %v813 = vadd.f32 %v698, %v803
      %v814 = vadd.f32 %v700, %v805
      %v815 = vld [vmem:[%s4] sm:$0x1]
      %v817 = vperm.slane %v815, 0
      %v819 = vadd.f32 %v807, %v817
      %v820 = vadd.f32 %v808, %v817
      %v821 = vadd.f32 %v809, %v817
      %v822 = vadd.f32 %v810, %v817
      %v823 = vadd.f32 %v811, %v817
      %v824 = vadd.f32 %v812, %v817
      %v825 = vadd.f32 %v813, %v817
      %v826 = vadd.f32 %v814, %v817
      %v827 = vmax.f32 %v819, 0.0
      %v828 = vmax.f32 %v820, 0.0
      %v829 = vmax.f32 %v821, 0.0
      %v830 = vmax.f32 %v822, 0.0
      %v831 = vmax.f32 %v823, 0.0
      %v832 = vmax.f32 %v824, 0.0
      %v833 = vmax.f32 %v825, 0.0
      %v834 = vmax.f32 %v826, 0.0
      %vm835 = vcmp.lt.s32.totalorder %v300, 6
      %v836 = vsel %vm835, 1, 0
      %vm837 = vcmp.eq.s32.totalorder %v836, 1
      %v838 = vsel %vm837, %v827, 0.0
      %v839 = vsel %vm837, %v828, 0.0
      %v840 = vsel %vm837, %v829, 0.0
      %v841 = vsel %vm837, %v830, 0.0
      %v842 = vsel %vm837, %v831, 0.0
      %v843 = vsel %vm837, %v832, 0.0
      %v844 = vsel %vm837, %v833, 0.0
      %v845 = vsel %vm837, %v834, 0.0
      %v846 = vrot.slane %v838, 4
      %v847 = vmax.f32 %v838, %v846
      %v848 = vrot.slane %v847, 2
      %v849 = vmax.f32 %v847, %v848
      %v850 = vrot.slane %v849, 1
      %v851 = vmax.f32 %v849, %v850
      %v852 = vrot.slane %v839, 4
      %v853 = vmax.f32 %v839, %v852
      %v854 = vrot.slane %v853, 2
      %v855 = vmax.f32 %v853, %v854
      %v856 = vrot.slane %v855, 1
      %v857 = vmax.f32 %v855, %v856
      %v858 = vrot.slane %v840, 4
      %v859 = vmax.f32 %v840, %v858
      %v860 = vrot.slane %v859, 2
      %v861 = vmax.f32 %v859, %v860
      %v862 = vrot.slane %v861, 1
      %v863 = vmax.f32 %v861, %v862
      %v864 = vrot.slane %v841, 4
      %v865 = vmax.f32 %v841, %v864
      %v866 = vrot.slane %v865, 2
      %v867 = vmax.f32 %v865, %v866
      %v868 = vrot.slane %v867, 1
      %v869 = vmax.f32 %v867, %v868
      %v870 = vrot.slane %v842, 4
      %v871 = vmax.f32 %v842, %v870
      %v872 = vrot.slane %v871, 2
      %v873 = vmax.f32 %v871, %v872
      %v874 = vrot.slane %v873, 1
      %v875 = vmax.f32 %v873, %v874
      %v876 = vrot.slane %v843, 4
      %v877 = vmax.f32 %v843, %v876
      %v878 = vrot.slane %v877, 2
      %v879 = vmax.f32 %v877, %v878
      %v880 = vrot.slane %v879, 1
      %v881 = vmax.f32 %v879, %v880
      %v882 = vrot.slane %v844, 4
      %v883 = vmax.f32 %v844, %v882
      %v884 = vrot.slane %v883, 2
      %v885 = vmax.f32 %v883, %v884
      %v886 = vrot.slane %v885, 1
      %v887 = vmax.f32 %v885, %v886
      %v888 = vrot.slane %v845, 4
      %v889 = vmax.f32 %v845, %v888
      %v890 = vrot.slane %v889, 2
      %v891 = vmax.f32 %v889, %v890
      %v892 = vrot.slane %v891, 1
      %v893 = vmax.f32 %v891, %v892
      %vm902 = vcmask 1041409
      %v903 = vsel %vm902, %v590, %v584
      %vm904 = vcmask 1042434
      %v905 = vsel %vm904, %v596, %v903
      %vm906 = vcmask 1043459
      %v907 = vsel %vm906, %v602, %v905
      %vm908 = vcmask 1044484
      %v909 = vsel %vm908, %v608, %v907
      %vm910 = vcmask 1045509
      %v911 = vsel %vm910, %v614, %v909
      %vm912 = vcmask 1046534
      %v913 = vsel %vm912, %v620, %v911
      %vm914 = vcmask 1047559
      %v915 = vsel %vm914, %v626, %v913
      %v925 = vsel %vm902, %v857, %v851
      %v926 = vsel %vm904, %v863, %v925
      %v927 = vsel %vm906, %v869, %v926
      %v928 = vsel %vm908, %v875, %v927
      %v929 = vsel %vm910, %v881, %v928
      %v930 = vsel %vm912, %v887, %v929
      %v931 = vsel %vm914, %v893, %v930
      %v933 = vld [vmem:[%s5] sm:$0xff]
      %v934 = vld [vmem:[%s5 + $0x8] sm:$0xff]
      %v935 = vld [vmem:[%s5 + $0x10] sm:$0xff]
      %v936 = vld [vmem:[%s5 + $0x18] sm:$0xff]
      %v937 = vld [vmem:[%s5 + $0x20] sm:$0xff]
      %v938 = vld [vmem:[%s5 + $0x28] sm:$0xff]
      %v939 = vld [vmem:[%s5 + $0x30] sm:$0xff]
      %v940 = vld [vmem:[%s5 + $0x38] sm:$0xff]
      %v941 = vld [vmem:[%s5 + $0x40] sm:$0xff]
      %v942 = vld [vmem:[%s5 + $0x48] sm:$0xff]
      %v943 = vld [vmem:[%s5 + $0x50] sm:$0xff]
      %v944 = vld [vmem:[%s5 + $0x58] sm:$0xff]
      %v945 = vld [vmem:[%s5 + $0x60] sm:$0xff]
      %v946 = vld [vmem:[%s5 + $0x68] sm:$0xff]
      %v947 = vld [vmem:[%s5 + $0x70] sm:$0xff]
      %v948 = vld [vmem:[%s5 + $0x78] sm:$0xff]
      %v949 = vld [vmem:[%s5 + $0x80] sm:$0xff]
      %v950 = vld [vmem:[%s5 + $0x88] sm:$0xff]
      %v951 = vld [vmem:[%s5 + $0x90] sm:$0xff]
      %v952 = vld [vmem:[%s5 + $0x98] sm:$0xff]
      %v953 = vld [vmem:[%s5 + $0xa0] sm:$0xff]
      %v954 = vld [vmem:[%s5 + $0xa8] sm:$0xff]
      %v955 = vld [vmem:[%s5 + $0xb0] sm:$0xff]
      %v956 = vld [vmem:[%s5 + $0xb8] sm:$0xff]
      %v957 = vld [vmem:[%s5 + $0xc0] sm:$0xff]
      %v958 = vld [vmem:[%s5 + $0xc8] sm:$0xff]
      %v959 = vld [vmem:[%s5 + $0xd0] sm:$0xff]
      %v960 = vld [vmem:[%s5 + $0xd8] sm:$0xff]
      %v961 = vld [vmem:[%s5 + $0xe0] sm:$0xff]
      %v962 = vld [vmem:[%s5 + $0xe8] sm:$0xff]
      %v963 = vld [vmem:[%s5 + $0xf0] sm:$0xff]
      %v964 = vld [vmem:[%s5 + $0xf8] sm:$0xff]
      %v965 = vld [vmem:[%s6] sm:$0x1]
      %v967 = vperm.slane %v965, 0
      %969 = vmatpush.msra.mxu0 %v948
      %970 = vmatpush.msra.mxu0 %v947
      %971 = vmatpush.msra.mxu0 %v946
      %972 = vmatpush.msra.mxu0 %v945
      %973 = vmatpush.msra.mxu0 %v944
      %974 = vmatpush.msra.mxu0 %v943
      %975 = vmatpush.msra.mxu0 %v942
      %976 = vmatpush.msra.mxu0 %v941
      %977 = vmatpush.msra.mxu0 %v940
      %978 = vmatpush.msra.mxu0 %v939
      %979 = vmatpush.msra.mxu0 %v938
      %980 = vmatpush.msra.mxu0 %v937
      %981 = vmatpush.msra.mxu0 %v936
      %982 = vmatpush.msra.mxu0 %v935
      %983 = vmatpush.msra.mxu0 %v934
      %984 = vmatpush.msra.mxu0 %v933
      %985 = vmatmul.f32.gmra.mxu0 %v915
      %v986 = vpop.f32.mrf.mxu0
      %v987 = vadd.f32 %v967, %v986
      %988 = vdwg.mxu0
      %989 = vmatpush.msra.mxu0 %v964
      %990 = vmatpush.msra.mxu0 %v963
      %991 = vmatpush.msra.mxu0 %v962
      %992 = vmatpush.msra.mxu0 %v961
      %993 = vmatpush.msra.mxu0 %v960
      %994 = vmatpush.msra.mxu0 %v959
      %995 = vmatpush.msra.mxu0 %v958
      %996 = vmatpush.msra.mxu0 %v957
      %997 = vmatpush.msra.mxu0 %v956
      %998 = vmatpush.msra.mxu0 %v955
      %999 = vmatpush.msra.mxu0 %v954
      %1000 = vmatpush.msra.mxu0 %v953
      %1001 = vmatpush.msra.mxu0 %v952
      %1002 = vmatpush.msra.mxu0 %v951
      %1003 = vmatpush.msra.mxu0 %v950
      %1004 = vmatpush.msra.mxu0 %v949
      %1005 = vmatmul.f32.gmra.mxu0 %v931
      %v1006 = vpop.f32.mrf.mxu0
      %v1007 = vadd.f32 %v987, %v1006
      %1008 = vdwg.mxu0
      %1009 = vst [vmem:[%s281] sm:$0xff] %v1007
      %p1010 = scmp.lt.s32.totalorder %s18, 1
      %s1011 = scalar_select %p1010, %s18, 1
      %s1012 = smul.addr %s1011, 8
      %s1013 = scalar_lea.vmem %s7, %s1012
      // Predicated region
      $region49: #{forward.1} parent=47 // pred_check
        %p1014 = pneg %p188
      $region50: #{forward.1} parent=47 // pred_check_branch
        %1016 = sbr.rel (%p1014) target = $region52
      $region51: #{forward.1} parent=47 // pred_region
        _
      $region52: #{forward.1} parent=47 // pred_fallthru
        _
    $region48: #{forward.1} parent=5 // pred_fallthru
      _
    %p1017 = scmp.le.s32.totalorder 2, %s13
    // Predicated region
    $region53: #{forward.1} parent=5 // pred_check
      %p1018 = pneg %p1017
    $region54: #{forward.1} parent=5 // pred_check_branch
      %1020 = sbr.rel (%p1018) target = $region56
    $region55: #{forward.1} parent=5 // pred_region
      %s1021 = ssub.s32 %s13, 2
      // Predicated region
      $region57: #{forward.1} parent=55 // pred_check
        %p1022 = pneg %p194
      $region58: #{forward.1} parent=55 // pred_check_branch
        %1024 = sbr.rel (%p1022) target = $region60
      $region59: #{forward.1} parent=55 // pred_region
        %p1025 = scmp.lt.s32.totalorder %s19, 1
        %s1026 = scalar_select %p1025, %s19, 1
        %s1027 = smul.addr %s1026, 8
        %s1028 = scalar_lea.vmem %s7, %s1027
      $region60: #{forward.1} parent=55 // pred_fallthru
        _
    $region56: #{forward.1} parent=5 // pred_fallthru
      _
  $region6: #{forward.1} parent=0 // loop_footer
    %s17 = sadd.s32 1, %s13
  $region7: #{forward.1} parent=0 // loop_footer_branch
    %12 = sbr.rel target = $region3
  $region8: #{forward.1} parent=0 // loop_exit
    _

// kernel: forward.1
$region0: #{forward.1}
  #allocation0 [shape = 'u32[]', space=smem, size = 0x4, offset = 0x4, fixed_abs, tag = 'smem constant byte address 0x4 - core index']
  #allocation1 [shape = 'u32[72,128]{1,0:T(1,128)}', space=vmem, size = 0x9000, scoped, tag = 'internal scratch']
  %s0 = inlined_call_operand.vmem [shape: bf16[16,16,16], index: 0, kind: input, shape index: {}]
  %s1 = inlined_call_operand.vmem [shape: bf16[2,16,128], index: 1, kind: input, shape index: {}]
  %s2 = inlined_call_operand.vmem [shape: bf16[3,16,128], index: 2, kind: input, shape index: {}]
  %s3 = inlined_call_operand.vmem [shape: f32[1,128], index: 3, kind: input, shape index: {}]
  %s4 = inlined_call_operand.vmem [shape: f32[1,128], index: 4, kind: input, shape index: {}]
  %s5 = inlined_call_operand.vmem [shape: f32[256,128], index: 5, kind: input, shape index: {}]
  %s6 = inlined_call_operand.vmem [shape: f32[1,128], index: 6, kind: input, shape index: {}]
  %s7 = inlined_call_operand.vmem [shape: f32[16,128], index: 7, kind: output, shape index: {}]
  %s8 = sld [smem:[#allocation0]]
  $region61: #{forward.1} parent=0
    _
  %s10 = ssub.s32 1, %s8
  %s11 = scalar_select 0, %s10, %s8
  loop: start=0, step=1, limit=4
  $region2: #{forward.1} parent=0 // loop_pre_header
    _
  $region3: #{forward.1} parent=0 // loop_header
    %s13 = sphi 0, %s17
    %p14 = scmp.ge.s32.totalorder %s13, 4
    %s23 = sphi 0, %s25
    %s26 = sphi 0, %s23
    %s27 = sphi 0, %s26
    %s43 = sphi 0, %s27
    %s47 = sphi 0, %s47
    %s49 = sphi 0, %s47
    %s50 = sphi 0, %s49
    %s64 = sphi 0, %s50
    %s68 = sphi 0, %s68
    %s70 = sphi 0, %s68
    %s71 = sphi 0, %s70
    %s85 = sphi 0, %s71
    %s89 = sphi 0, %s89
    %s91 = sphi 0, %s89
    %s92 = sphi 0, %s91
    %s106 = sphi 0, %s92
    %s110 = sphi 0, %s110
    %s112 = sphi 0, %s110
    %s113 = sphi 0, %s112
    %s127 = sphi 0, %s113
    %s131 = sphi 0, %s131
    %s133 = sphi 0, %s131
    %s134 = sphi 0, %s133
    %s148 = sphi 0, %s134
    %s152 = sphi 0, %s152
    %s154 = sphi 0, %s152
    %s155 = sphi 0, %s154
    %s169 = sphi 0, %s155
    %s175 = sphi 0, %s177
    %s178 = sphi 0, %s175
    %s179 = sphi 0, %s178
    %s195 = sphi 0, %s179
  $region4: #{forward.1} parent=0 // loop_header_branch
    %16 = sbr.rel (%p14) target = $region8
  $region5: #{forward.1} parent=0 // loop_body
    %s18 = ssub.s32 %s13, 1
    %s19 = ssub.s32 %s13, 2
    %s20 = sadd.s32 %s13, 1
    %s21 = ssub.s32 %s13, %s20
    %p22 = scmp.eq.s32.totalorder %s21, 0
    %s24 = sadd.s32 %s23, 1
    %s25 = scalar_select %p22, %s23, %s24
    %p28 = pneg %p22
    %p29 = scmp.eq.s32.totalorder %s13, 1
    %p30 = por %p28, %p29
    %p31 = scmp.ne.s32.totalorder %s23, %s26
    %p32 = scmp.eq.s32.totalorder %s13, 0
    %p33 = por %p31, %p32
    %p34 = scmp.ne.s32.totalorder %s23, %s26
    %p35 = scmp.eq.s32.totalorder %s18, 1
    %p36 = por %p34, %p35
    %p37 = scmp.ne.s32.totalorder %s26, %s27
    %p38 = scmp.eq.s32.totalorder %s18, 0
    %p39 = por %p37, %p38
    %p40 = scmp.ne.s32.totalorder %s26, %s27
    %p41 = scmp.eq.s32.totalorder %s19, 1
    %p42 = por %p40, %p41
    %p44 = scmp.ne.s32.totalorder %s27, %s43
    %p45 = scmp.eq.s32.totalorder %s19, 0
    %p46 = por %p44, %p45
    %s48 = sadd.s32 %s47, 1
    %p51 = scmp.eq.s32.totalorder %s13, 1
    %p52 = scmp.ne.s32.totalorder %s47, %s49
    %p53 = scmp.eq.s32.totalorder %s13, 0
    %p54 = por %p52, %p53
    %p55 = scmp.ne.s32.totalorder %s47, %s49
    %p56 = scmp.eq.s32.totalorder %s18, 1
    %p57 = por %p55, %p56
    %p58 = scmp.ne.s32.totalorder %s49, %s50
    %p59 = scmp.eq.s32.totalorder %s18, 0
    %p60 = por %p58, %p59
    %p61 = scmp.ne.s32.totalorder %s49, %s50
    %p62 = scmp.eq.s32.totalorder %s19, 1
    %p63 = por %p61, %p62
    %p65 = scmp.ne.s32.totalorder %s50, %s64
    %p66 = scmp.eq.s32.totalorder %s19, 0
    %p67 = por %p65, %p66
    %s69 = sadd.s32 %s68, 1
    %p72 = scmp.eq.s32.totalorder %s13, 1
    %p73 = scmp.ne.s32.totalorder %s68, %s70
    %p74 = scmp.eq.s32.totalorder %s13, 0
    %p75 = por %p73, %p74
    %p76 = scmp.ne.s32.totalorder %s68, %s70
    %p77 = scmp.eq.s32.totalorder %s18, 1
    %p78 = por %p76, %p77
    %p79 = scmp.ne.s32.totalorder %s70, %s71
    %p80 = scmp.eq.s32.totalorder %s18, 0
    %p81 = por %p79, %p80
    %p82 = scmp.ne.s32.totalorder %s70, %s71
    %p83 = scmp.eq.s32.totalorder %s19, 1
    %p84 = por %p82, %p83
    %p86 = scmp.ne.s32.totalorder %s71, %s85
    %p87 = scmp.eq.s32.totalorder %s19, 0
    %p88 = por %p86, %p87
    %s90 = sadd.s32 %s89, 1
    %p93 = scmp.eq.s32.totalorder %s13, 1
    %p94 = scmp.ne.s32.totalorder %s89, %s91
    %p95 = scmp.eq.s32.totalorder %s13, 0
    %p96 = por %p94, %p95
    %p97 = scmp.ne.s32.totalorder %s89, %s91
    %p98 = scmp.eq.s32.totalorder %s18, 1
    %p99 = por %p97, %p98
    %p100 = scmp.ne.s32.totalorder %s91, %s92
    %p101 = scmp.eq.s32.totalorder %s18, 0
    %p102 = por %p100, %p101
    %p103 = scmp.ne.s32.totalorder %s91, %s92
    %p104 = scmp.eq.s32.totalorder %s19, 1
    %p105 = por %p103, %p104
    %p107 = scmp.ne.s32.totalorder %s92, %s106
    %p108 = scmp.eq.s32.totalorder %s19, 0
    %p109 = por %p107, %p108
    %s111 = sadd.s32 %s110, 1
    %p114 = scmp.eq.s32.totalorder %s13, 1
    %p115 = scmp.ne.s32.totalorder %s110, %s112
    %p116 = scmp.eq.s32.totalorder %s13, 0
    %p117 = por %p115, %p116
    %p118 = scmp.ne.s32.totalorder %s110, %s112
    %p119 = scmp.eq.s32.totalorder %s18, 1
    %p120 = por %p118, %p119
    %p121 = scmp.ne.s32.totalorder %s112, %s113
    %p122 = scmp.eq.s32.totalorder %s18, 0
    %p123 = por %p121, %p122
    %p124 = scmp.ne.s32.totalorder %s112, %s113
    %p125 = scmp.eq.s32.totalorder %s19, 1
    %p126 = por %p124, %p125
    %p128 = scmp.ne.s32.totalorder %s113, %s127
    %p129 = scmp.eq.s32.totalorder %s19, 0
    %p130 = por %p128, %p129
    %s132 = sadd.s32 %s131, 1
    %p135 = scmp.eq.s32.totalorder %s13, 1
    %p136 = scmp.ne.s32.totalorder %s131, %s133
    %p137 = scmp.eq.s32.totalorder %s13, 0
    %p138 = por %p136, %p137
    %p139 = scmp.ne.s32.totalorder %s131, %s133
    %p140 = scmp.eq.s32.totalorder %s18, 1
    %p141 = por %p139, %p140
    %p142 = scmp.ne.s32.totalorder %s133, %s134
    %p143 = scmp.eq.s32.totalorder %s18, 0
    %p144 = por %p142, %p143
    %p145 = scmp.ne.s32.totalorder %s133, %s134
    %p146 = scmp.eq.s32.totalorder %s19, 1
    %p147 = por %p145, %p146
    %p149 = scmp.ne.s32.totalorder %s134, %s148
    %p150 = scmp.eq.s32.totalorder %s19, 0
    %p151 = por %p149, %p150
    %s153 = sadd.s32 %s152, 1
    %p156 = scmp.eq.s32.totalorder %s13, 1
    %p157 = scmp.ne.s32.totalorder %s152, %s154
    %p158 = scmp.eq.s32.totalorder %s13, 0
    %p159 = por %p157, %p158
    %p160 = scmp.ne.s32.totalorder %s152, %s154
    %p161 = scmp.eq.s32.totalorder %s18, 1
    %p162 = por %p160, %p161
    %p163 = scmp.ne.s32.totalorder %s154, %s155
    %p164 = scmp.eq.s32.totalorder %s18, 0
    %p165 = por %p163, %p164
    %p166 = scmp.ne.s32.totalorder %s154, %s155
    %p167 = scmp.eq.s32.totalorder %s19, 1
    %p168 = por %p166, %p167
    %p170 = scmp.ne.s32.totalorder %s155, %s169
    %p171 = scmp.eq.s32.totalorder %s19, 0
    %p172 = por %p170, %p171
    %s173 = ssub.s32 %s13, %s20
    %p174 = scmp.eq.s32.totalorder %s173, 0
    %s176 = sadd.s32 %s175, 1
    %s177 = scalar_select %p174, %s175, %s176
    %p180 = pneg %p174
    %p181 = scmp.eq.s32.totalorder %s13, 1
    %p182 = por %p180, %p181
    %p183 = scmp.ne.s32.totalorder %s175, %s178
    %p184 = scmp.eq.s32.totalorder %s13, 0
    %p185 = por %p183, %p184
    %p186 = scmp.ne.s32.totalorder %s175, %s178
    %p187 = scmp.eq.s32.totalorder %s18, 1
    %p188 = por %p186, %p187
    %p189 = scmp.ne.s32.totalorder %s178, %s179
    %p190 = scmp.eq.s32.totalorder %s18, 0
    %p191 = por %p189, %p190
    %p192 = scmp.ne.s32.totalorder %s178, %s179
    %p193 = scmp.eq.s32.totalorder %s19, 1
    %p194 = por %p192, %p193
    %p196 = scmp.ne.s32.totalorder %s179, %s195
    %p197 = scmp.eq.s32.totalorder %s19, 0
    %p198 = por %p196, %p197
    %p199 = scmp.le.s32.totalorder 1, %s13
    %p200 = scmp.lt.s32.totalorder %s13, 3
    %p201 = pnand %p199, %p200
    %p202 = pneg %p201
    // Predicated region
    $region9: #{forward.1} parent=5 // pred_check
      _
    $region10: #{forward.1} parent=5 // pred_check_branch
      %204 = sbr.rel (%p201) target = $region12
    $region11: #{forward.1} parent=5 // pred_region
      %s205 = ssub.s32 %s13, 1
      // Predicated region
      $region13: #{forward.1} parent=11 // pred_check
        %p206 = pneg %p60
      $region14: #{forward.1} parent=11 // pred_check_branch
        %208 = sbr.rel (%p206) target = $region16
      $region15: #{forward.1} parent=11 // pred_region
        _
      $region16: #{forward.1} parent=11 // pred_fallthru
        _
      // Predicated region
      $region17: #{forward.1} parent=11 // pred_check
        %p209 = pneg %p81
      $region18: #{forward.1} parent=11 // pred_check_branch
        %211 = sbr.rel (%p209) target = $region20
      $region19: #{forward.1} parent=11 // pred_region
        _
      $region20: #{forward.1} parent=11 // pred_fallthru
        _
      // Predicated region
      $region21: #{forward.1} parent=11 // pred_check
        %p212 = pneg %p102
      $region22: #{forward.1} parent=11 // pred_check_branch
        %214 = sbr.rel (%p212) target = $region24
      $region23: #{forward.1} parent=11 // pred_region
        _
      $region24: #{forward.1} parent=11 // pred_fallthru
        _
      // Predicated region
      $region25: #{forward.1} parent=11 // pred_check
        %p215 = pneg %p123
      $region26: #{forward.1} parent=11 // pred_check_branch
        %217 = sbr.rel (%p215) target = $region28
      $region27: #{forward.1} parent=11 // pred_region
        _
      $region28: #{forward.1} parent=11 // pred_fallthru
        _
      // Predicated region
      $region29: #{forward.1} parent=11 // pred_check
        %p218 = pneg %p144
      $region30: #{forward.1} parent=11 // pred_check_branch
        %220 = sbr.rel (%p218) target = $region32
      $region31: #{forward.1} parent=11 // pred_region
        _
      $region32: #{forward.1} parent=11 // pred_fallthru
        _
      // Predicated region
      $region33: #{forward.1} parent=11 // pred_check
        %p221 = pneg %p165
      $region34: #{forward.1} parent=11 // pred_check_branch
        %223 = sbr.rel (%p221) target = $region36
      $region35: #{forward.1} parent=11 // pred_region
        _
      $region36: #{forward.1} parent=11 // pred_fallthru
        _
    $region12: #{forward.1} parent=5 // pred_fallthru
      _
    %p224 = scmp.lt.s32.totalorder %s13, 2
    // Predicated region
    $region37: #{forward.1} parent=5 // pred_check
      %p225 = pneg %p224
    $region38: #{forward.1} parent=5 // pred_check_branch
      %227 = sbr.rel (%p225) target = $region40
    $region39: #{forward.1} parent=5 // pred_region
      // Predicated region
      $region41: #{forward.1} parent=39 // pred_check
        %p228 = pneg %p33
      $region42: #{forward.1} parent=39 // pred_check_branch
        %230 = sbr.rel (%p228) target = $region44
      $region43: #{forward.1} parent=39 // pred_region
        %s231 = smul.u32 8, %s13
        %p232 = scmp.lt.s32.totalorder %s231, 15
        %s233 = scalar_select %p232, %s231, 15
        %s234 = smul.addr %s233, 2
        %s235 = smul.addr %s234, 4
        %s236 = scalar_lea.vmem %s0, %s235
        %s237 = smul.u32 8, %s13
      $region44: #{forward.1} parent=39 // pred_fallthru
        _
    $region40: #{forward.1} parent=5 // pred_fallthru
      _
    %p238 = scmp.le.s32.totalorder 1, %s13
    %p239 = scmp.lt.s32.totalorder %s13, 3
    %p240 = pnand %p238, %p239
    %p241 = pneg %p240
    // Predicated region
    $region45: #{forward.1} parent=5 // pred_check
      _
    $region46: #{forward.1} parent=5 // pred_check_branch
      %243 = sbr.rel (%p240) target = $region48
    $region47: #{forward.1} parent=5 // pred_region
      %s244 = ssub.s32 %s13, 1
      %s245 = smul.u32 8, %s18
      %p246 = scmp.lt.s32.totalorder %s245, 15
      %s247 = scalar_select %p246, %s245, 15
      %s248 = smul.addr %s247, 2
      %s249 = smul.addr %s248, 4
      %s250 = scalar_lea.vmem %s0, %s249
      %p251 = pneg %p39
      %p252 = pneg %p36
      %p253 = pneg %p60
      %p254 = pneg %p57
      %p255 = pneg %p81
      %p256 = pneg %p78
      %p257 = pneg %p102
      %p258 = pneg %p99
      %p259 = pneg %p123
      %p260 = pneg %p120
      %p261 = pneg %p144
      %p262 = pneg %p141
      %p263 = pneg %p165
      %p264 = pneg %p162
      %p265 = pneg %p191
      %p266 = pneg %p188
      %p267 = scmp.lt.s32.totalorder %s18, 1
      %s268 = scalar_select %p267, %s18, 1
      %s269 = smul.addr %s268, 8
      %s270 = scalar_lea.vmem %s7, %s269
      %s271 = smul.u32 8, %s18
      %p272 = scmp.lt.s32.totalorder %s271, 15
      %s273 = scalar_select %p272, %s271, 15
      %s274 = smul.addr %s273, 2
      %s275 = smul.addr %s274, 4
      %s276 = scalar_lea.vmem %s0, %s275
      %s277 = smul.u32 8, %s18
      %p278 = scmp.lt.s32.totalorder %s18, 1
      %s279 = scalar_select %p278, %s18, 1
      %s280 = smul.addr %s279, 8
      %s281 = scalar_lea.vmem %s7, %s280
      %v283 = vld [vmem:[%s276] sm:$0xf]
      %v284 = vld [vmem:[%s276 + $0x4] sm:$0xf]
      %v285 = vld [vmem:[%s276 + $0x8] sm:$0xf]
      %v286 = vld [vmem:[%s276 + $0xc] sm:$0xf]
      %v287 = vld [vmem:[%s276 + $0x10] sm:$0xf]
      %v288 = vld [vmem:[%s276 + $0x14] sm:$0xf]
      %v289 = vld [vmem:[%s276 + $0x18] sm:$0xf]
      %v290 = vld [vmem:[%s276 + $0x1c] sm:$0xf]
      %v291 = vld [vmem:[%s276 + $0x20] sm:$0xf]
      %v292 = vld [vmem:[%s276 + $0x24] sm:$0xf]
      %v293 = vld [vmem:[%s276 + $0x28] sm:$0xf]
      %v294 = vld [vmem:[%s276 + $0x2c] sm:$0xf]
      %v295 = vld [vmem:[%s276 + $0x30] sm:$0xf]
      %v296 = vld [vmem:[%s276 + $0x34] sm:$0xf]
      %v297 = vld [vmem:[%s276 + $0x38] sm:$0xf]
      %v298 = vld [vmem:[%s276 + $0x3c] sm:$0xf]
      %v299 = vlaneseq
      %v300 = vshrl.u32 %v299, 7
      %v301 = vld [vmem:[%s1] sm:$0xf]
      %v302 = vld [vmem:[%s1 + $0x4] sm:$0xf]
      %vm303 = vsmask.f32 3328
      %vm304 = vsmask.f32 7440
      %vm305 = vmor %vm303, %vm304
      %v307 = vshrl.u32 %v283, 16
      %v309 = vrot.slane %v307, 4
      %v310 = vshll.u32 %v283, 16
      %v312 = vrot.slane %v310, 5
      %v313 = vor.u32 %v309, %v312
      %v314 = vrot.slane %v313, 4
      %v316 = vshll.u32 %v284, 16
      %v318 = vrot.slane %v316, 5
      %v319 = vsel %vm305, %v314, %v318
      %v321 = vshrl.u32 %v285, 16
      %v323 = vrot.slane %v321, 4
      %v324 = vshll.u32 %v285, 16
      %v326 = vrot.slane %v324, 5
      %v327 = vor.u32 %v323, %v326
      %v328 = vrot.slane %v327, 4
      %v330 = vshll.u32 %v286, 16
      %v332 = vrot.slane %v330, 5
      %v333 = vsel %vm305, %v328, %v332
      %v335 = vshrl.u32 %v287, 16
      %v337 = vrot.slane %v335, 4
      %v338 = vshll.u32 %v287, 16
      %v340 = vrot.slane %v338, 5
      %v341 = vor.u32 %v337, %v340
      %v342 = vrot.slane %v341, 4
      %v344 = vshll.u32 %v288, 16
      %v346 = vrot.slane %v344, 5
      %v347 = vsel %vm305, %v342, %v346
      %v349 = vshrl.u32 %v289, 16
      %v351 = vrot.slane %v349, 4
      %v352 = vshll.u32 %v289, 16
      %v354 = vrot.slane %v352, 5
      %v355 = vor.u32 %v351, %v354
      %v356 = vrot.slane %v355, 4
      %v358 = vshll.u32 %v290, 16
      %v360 = vrot.slane %v358, 5
      %v361 = vsel %vm305, %v356, %v360
      %v363 = vshrl.u32 %v291, 16
      %v365 = vrot.slane %v363, 4
      %v366 = vshll.u32 %v291, 16
      %v368 = vrot.slane %v366, 5
      %v369 = vor.u32 %v365, %v368
      %v370 = vrot.slane %v369, 4
      %v372 = vshll.u32 %v292, 16
      %v374 = vrot.slane %v372, 5
      %v375 = vsel %vm305, %v370, %v374
      %v377 = vshrl.u32 %v293, 16
      %v379 = vrot.slane %v377, 4
      %v380 = vshll.u32 %v293, 16
      %v382 = vrot.slane %v380, 5
      %v383 = vor.u32 %v379, %v382
      %v384 = vrot.slane %v383, 4
      %v386 = vshll.u32 %v294, 16
      %v388 = vrot.slane %v386, 5
      %v389 = vsel %vm305, %v384, %v388
      %v391 = vshrl.u32 %v295, 16
      %v393 = vrot.slane %v391, 4
      %v394 = vshll.u32 %v295, 16
      %v396 = vrot.slane %v394, 5
      %v397 = vor.u32 %v393, %v396
      %v398 = vrot.slane %v397, 4
      %v400 = vshll.u32 %v296, 16
      %v402 = vrot.slane %v400, 5
      %v403 = vsel %vm305, %v398, %v402
      %v405 = vshrl.u32 %v297, 16
      %v407 = vrot.slane %v405, 4
      %v408 = vshll.u32 %v297, 16
      %v410 = vrot.slane %v408, 5
      %v411 = vor.u32 %v407, %v410
      %v412 = vrot.slane %v411, 4
      %v414 = vshll.u32 %v298, 16
      %v416 = vrot.slane %v414, 5
      %v417 = vsel %vm305, %v412, %v416
      %s418 = scalar_lea.vmem %s1, 8
      %v419 = vld [vmem:[%s418] sm:$0xf]
      %v420 = vld [vmem:[%s418 + $0x4] sm:$0xf]
      %v421 = vunpack.c.l.b16 %v319
      %v422 = vunpack.c.l.b16 %v333
      %v423 = vunpack.c.l.b16 %v347
      %v424 = vunpack.c.l.b16 %v361
      %v425 = vunpack.c.l.b16 %v375
      %v426 = vunpack.c.l.b16 %v389
      %v427 = vunpack.c.l.b16 %v403
      %v428 = vunpack.c.l.b16 %v417
      %v429 = vpack.c.b16 %v422, %v421
      %v430 = vpack.c.b16 %v424, %v423
      %v431 = vpack.c.b16 %v426, %v425
      %v432 = vpack.c.b16 %v428, %v427
      %v435 = vunpack.c.l.b16 %v419
      %v436 = vunpack.c.l.b16 %v420
      %v437 = vpack.c.b16 %v436, %v435
      %vm439 = vcmask 130048
      %v441 = vsel %vm439, %v429, 0
      %v444 = vsel %vm439, %v430, 0
      %v447 = vsel %vm439, %v431, 0
      %v450 = vsel %vm439, %v432, 0
      %452 = vmatpush.bf16.msra.mxu0 0
      %453 = vmatpush.bf16.msra.mxu0 0
      %454 = vmatpush.bf16.msra.mxu0 0
      %455 = vmatpush.bf16.msra.mxu0 0
      %456 = vmatpush.bf16.msra.mxu0 0
      %457 = vmatpush.bf16.msra.mxu0 0
      %458 = vmatpush.bf16.msra.mxu0 0
      %459 = vmatpush.bf16.msra.mxu0 %v437
      %460 = vmatmul.bf16.gmra.mxu0 %v441
      %v461 = vpop.f32.mrf.mxu0
      %v462 = vadd.f32 0.0, %v461
      %v463 = vpop.f32.mrf.mxu0
      %v464 = vadd.f32 0.0, %v463
      %465 = vmatmul.bf16.gmra.mxu0 %v444
      %v466 = vpop.f32.mrf.mxu0
      %v467 = vadd.f32 0.0, %v466
      %v468 = vpop.f32.mrf.mxu0
      %v469 = vadd.f32 0.0, %v468
      %470 = vmatmul.bf16.gmra.mxu0 %v447
      %v471 = vpop.f32.mrf.mxu0
      %v472 = vadd.f32 0.0, %v471
      %v473 = vpop.f32.mrf.mxu0
      %v474 = vadd.f32 0.0, %v473
      %475 = vmatmul.bf16.gmra.mxu0 %v450
      %v476 = vpop.f32.mrf.mxu0
      %v477 = vadd.f32 0.0, %v476
      %v478 = vpop.f32.mrf.mxu0
      %v479 = vadd.f32 0.0, %v478
      %480 = vdwg.mxu0
      %v489 = vunpack.c.l.b16 %v283
      %v490 = vunpack.c.l.b16 %v285
      %v491 = vunpack.c.l.b16 %v287
      %v492 = vunpack.c.l.b16 %v289
      %v493 = vunpack.c.l.b16 %v291
      %v494 = vunpack.c.l.b16 %v293
      %v495 = vunpack.c.l.b16 %v295
      %v496 = vunpack.c.l.b16 %v297
      %v497 = vpack.c.b16 %v490, %v489
      %v498 = vpack.c.b16 %v492, %v491
      %v499 = vpack.c.b16 %v494, %v493
      %v500 = vpack.c.b16 %v496, %v495
      %v503 = vunpack.c.l.b16 %v301
      %v504 = vunpack.c.l.b16 %v302
      %v505 = vpack.c.b16 %v504, %v503
      %v508 = vsel %vm439, %v497, 0
      %v511 = vsel %vm439, %v498, 0
      %v514 = vsel %vm439, %v499, 0
      %v517 = vsel %vm439, %v500, 0
      %519 = vmatpush.bf16.msra.mxu0 0
      %520 = vmatpush.bf16.msra.mxu0 0
      %521 = vmatpush.bf16.msra.mxu0 0
      %522 = vmatpush.bf16.msra.mxu0 0
      %523 = vmatpush.bf16.msra.mxu0 0
      %524 = vmatpush.bf16.msra.mxu0 0
      %525 = vmatpush.bf16.msra.mxu0 0
      %526 = vmatpush.bf16.msra.mxu0 %v505
      %527 = vmatmul.bf16.gmra.mxu0 %v508
      %v528 = vpop.f32.mrf.mxu0
      %v529 = vadd.f32 %v462, %v528
      %v530 = vpop.f32.mrf.mxu0
      %v531 = vadd.f32 %v464, %v530
      %532 = vmatmul.bf16.gmra.mxu0 %v511
      %v533 = vpop.f32.mrf.mxu0
      %v534 = vadd.f32 %v467, %v533
      %v535 = vpop.f32.mrf.mxu0
      %v536 = vadd.f32 %v469, %v535
      %537 = vmatmul.bf16.gmra.mxu0 %v514
      %v538 = vpop.f32.mrf.mxu0
      %v539 = vadd.f32 %v472, %v538
      %v540 = vpop.f32.mrf.mxu0
      %v541 = vadd.f32 %v474, %v540
      %542 = vmatmul.bf16.gmra.mxu0 %v517
      %v543 = vpop.f32.mrf.mxu0
      %v544 = vadd.f32 %v477, %v543
      %v545 = vpop.f32.mrf.mxu0
      %v546 = vadd.f32 %v479, %v545
      %547 = vdwg.mxu0
      %v548 = vld [vmem:[%s3] sm:$0x1]
      %v550 = vperm.slane %v548, 0
      %v552 = vadd.f32 %v529, %v550
      %v553 = vadd.f32 %v531, %v550
      %v554 = vadd.f32 %v534, %v550
      %v555 = vadd.f32 %v536, %v550
      %v556 = vadd.f32 %v539, %v550
      %v557 = vadd.f32 %v541, %v550
      %v558 = vadd.f32 %v544, %v550
      %v559 = vadd.f32 %v546, %v550
      %v560 = vmax.f32 %v552, 0.0
      %v561 = vmax.f32 %v553, 0.0
      %v562 = vmax.f32 %v554, 0.0
      %v563 = vmax.f32 %v555, 0.0
      %v564 = vmax.f32 %v556, 0.0
      %v565 = vmax.f32 %v557, 0.0
      %v566 = vmax.f32 %v558, 0.0
      %v567 = vmax.f32 %v559, 0.0
      %vm568 = vcmp.lt.s32.totalorder %v300, 7
      %v569 = vsel %vm568, 1, 0
      %vm570 = vcmp.eq.s32.totalorder %v569, 1
      %v571 = vsel %vm570, %v560, 0.0
      %v572 = vsel %vm570, %v561, 0.0
      %v573 = vsel %vm570, %v562, 0.0
      %v574 = vsel %vm570, %v563, 0.0
      %v575 = vsel %vm570, %v564, 0.0
      %v576 = vsel %vm570, %v565, 0.0
      %v577 = vsel %vm570, %v566, 0.0
      %v578 = vsel %vm570, %v567, 0.0
      %v579 = vrot.slane %v571, 4
      %v580 = vmax.f32 %v571, %v579
      %v581 = vrot.slane %v580, 2
      %v582 = vmax.f32 %v580, %v581
      %v583 = vrot.slane %v582, 1
      %v584 = vmax.f32 %v582, %v583
      %v585 = vrot.slane %v572, 4
      %v586 = vmax.f32 %v572, %v585
      %v587 = vrot.slane %v586, 2
      %v588 = vmax.f32 %v586, %v587
      %v589 = vrot.slane %v588, 1
      %v590 = vmax.f32 %v588, %v589
      %v591 = vrot.slane %v573, 4
      %v592 = vmax.f32 %v573, %v591
      %v593 = vrot.slane %v592, 2
      %v594 = vmax.f32 %v592, %v593
      %v595 = vrot.slane %v594, 1
      %v596 = vmax.f32 %v594, %v595
      %v597 = vrot.slane %v574, 4
      %v598 = vmax.f32 %v574, %v597
      %v599 = vrot.slane %v598, 2
      %v600 = vmax.f32 %v598, %v599
      %v601 = vrot.slane %v600, 1
      %v602 = vmax.f32 %v600, %v601
      %v603 = vrot.slane %v575, 4
      %v604 = vmax.f32 %v575, %v603
      %v605 = vrot.slane %v604, 2
      %v606 = vmax.f32 %v604, %v605
      %v607 = vrot.slane %v606, 1
      %v608 = vmax.f32 %v606, %v607
      %v609 = vrot.slane %v576, 4
      %v610 = vmax.f32 %v576, %v609
      %v611 = vrot.slane %v610, 2
      %v612 = vmax.f32 %v610, %v611
      %v613 = vrot.slane %v612, 1
      %v614 = vmax.f32 %v612, %v613
      %v615 = vrot.slane %v577, 4
      %v616 = vmax.f32 %v577, %v615
      %v617 = vrot.slane %v616, 2
      %v618 = vmax.f32 %v616, %v617
      %v619 = vrot.slane %v618, 1
      %v620 = vmax.f32 %v618, %v619
      %v621 = vrot.slane %v578, 4
      %v622 = vmax.f32 %v578, %v621
      %v623 = vrot.slane %v622, 2
      %v624 = vmax.f32 %v622, %v623
      %v625 = vrot.slane %v624, 1
      %v626 = vmax.f32 %v624, %v625
      %v627 = vld [vmem:[%s2] sm:$0xf]
      %v628 = vld [vmem:[%s2 + $0x4] sm:$0xf]
      %s629 = scalar_lea.vmem %s2, 8
      %v630 = vld [vmem:[%s629] sm:$0xf]
      %v631 = vld [vmem:[%s629 + $0x4] sm:$0xf]
      %v634 = vunpack.c.l.b16 %v630
      %v635 = vunpack.c.l.b16 %v631
      %v636 = vpack.c.b16 %v635, %v634
      %638 = vmatpush.bf16.msra.mxu0 0
      %639 = vmatpush.bf16.msra.mxu0 0
      %640 = vmatpush.bf16.msra.mxu0 0
      %641 = vmatpush.bf16.msra.mxu0 0
      %642 = vmatpush.bf16.msra.mxu0 0
      %643 = vmatpush.bf16.msra.mxu0 0
      %644 = vmatpush.bf16.msra.mxu0 0
      %645 = vmatpush.bf16.msra.mxu0 %v636
      %646 = vmatmul.bf16.gmra.mxu0 %v441
      %v647 = vpop.f32.mrf.mxu0
      %v648 = vadd.f32 0.0, %v647
      %v649 = vpop.f32.mrf.mxu0
      %v650 = vadd.f32 0.0, %v649
      %651 = vmatmul.bf16.gmra.mxu0 %v444
      %v652 = vpop.f32.mrf.mxu0
      %v653 = vadd.f32 0.0, %v652
      %v654 = vpop.f32.mrf.mxu0
      %v655 = vadd.f32 0.0, %v654
      %656 = vmatmul.bf16.gmra.mxu0 %v447
      %v657 = vpop.f32.mrf.mxu0
      %v658 = vadd.f32 0.0, %v657
      %v659 = vpop.f32.mrf.mxu0
      %v660 = vadd.f32 0.0, %v659
      %661 = vmatmul.bf16.gmra.mxu0 %v450
      %v662 = vpop.f32.mrf.mxu0
      %v663 = vadd.f32 0.0, %v662
      %v664 = vpop.f32.mrf.mxu0
      %v665 = vadd.f32 0.0, %v664
      %666 = vdwg.mxu0
      %v669 = vunpack.c.l.b16 %v627
      %v670 = vunpack.c.l.b16 %v628
      %v671 = vpack.c.b16 %v670, %v669
      %673 = vmatpush.bf16.msra.mxu0 0
      %674 = vmatpush.bf16.msra.mxu0 0
      %675 = vmatpush.bf16.msra.mxu0 0
      %676 = vmatpush.bf16.msra.mxu0 0
      %677 = vmatpush.bf16.msra.mxu0 0
      %678 = vmatpush.bf16.msra.mxu0 0
      %679 = vmatpush.bf16.msra.mxu0 0
      %680 = vmatpush.bf16.msra.mxu0 %v671
      %681 = vmatmul.bf16.gmra.mxu0 %v508
      %v682 = vpop.f32.mrf.mxu0
      %v683 = vadd.f32 %v648, %v682
      %v684 = vpop.f32.mrf.mxu0
      %v685 = vadd.f32 %v650, %v684
      %686 = vmatmul.bf16.gmra.mxu0 %v511
      %v687 = vpop.f32.mrf.mxu0
      %v688 = vadd.f32 %v653, %v687
      %v689 = vpop.f32.mrf.mxu0
      %v690 = vadd.f32 %v655, %v689
      %691 = vmatmul.bf16.gmra.mxu0 %v514
      %v692 = vpop.f32.mrf.mxu0
      %v693 = vadd.f32 %v658, %v692
      %v694 = vpop.f32.mrf.mxu0
      %v695 = vadd.f32 %v660, %v694
      %696 = vmatmul.bf16.gmra.mxu0 %v517
      %v697 = vpop.f32.mrf.mxu0
      %v698 = vadd.f32 %v663, %v697
      %v699 = vpop.f32.mrf.mxu0
      %v700 = vadd.f32 %v665, %v699
      %701 = vdwg.mxu0
      %vm710 = vcmask 1042432
      %vm711 = vcmask 1046532
      %vm712 = vmor %vm710, %vm711
      %v713 = vrot.slane %v283, 5
      %v714 = vrot.slane %v713, 4
      %v715 = vrot.slane %v284, 5
      %v716 = vsel %vm712, %v714, %v715
      %v717 = vrot.slane %v285, 5
      %v718 = vrot.slane %v717, 4
      %v719 = vrot.slane %v286, 5
      %v720 = vsel %vm712, %v718, %v719
      %v721 = vrot.slane %v287, 5
      %v722 = vrot.slane %v721, 4
      %v723 = vrot.slane %v288, 5
      %v724 = vsel %vm712, %v722, %v723
      %v725 = vrot.slane %v289, 5
      %v726 = vrot.slane %v725, 4
      %v727 = vrot.slane %v290, 5
      %v728 = vsel %vm712, %v726, %v727
      %v729 = vrot.slane %v291, 5
      %v730 = vrot.slane %v729, 4
      %v731 = vrot.slane %v292, 5
      %v732 = vsel %vm712, %v730, %v731
      %v733 = vrot.slane %v293, 5
      %v734 = vrot.slane %v733, 4
      %v735 = vrot.slane %v294, 5
      %v736 = vsel %vm712, %v734, %v735
      %v737 = vrot.slane %v295, 5
      %v738 = vrot.slane %v737, 4
      %v739 = vrot.slane %v296, 5
      %v740 = vsel %vm712, %v738, %v739
      %v741 = vrot.slane %v297, 5
      %v742 = vrot.slane %v741, 4
      %v743 = vrot.slane %v298, 5
      %v744 = vsel %vm712, %v742, %v743
      %s745 = scalar_lea.vmem %s2, 16
      %v746 = vld [vmem:[%s745] sm:$0xf]
      %v747 = vld [vmem:[%s745 + $0x4] sm:$0xf]
      %v748 = vunpack.c.l.b16 %v716
      %v749 = vunpack.c.l.b16 %v720
      %v750 = vunpack.c.l.b16 %v724
      %v751 = vunpack.c.l.b16 %v728
      %v752 = vunpack.c.l.b16 %v732
      %v753 = vunpack.c.l.b16 %v736
      %v754 = vunpack.c.l.b16 %v740
      %v755 = vunpack.c.l.b16 %v744
      %v756 = vpack.c.b16 %v749, %v748
      %v757 = vpack.c.b16 %v751, %v750
      %v758 = vpack.c.b16 %v753, %v752
      %v759 = vpack.c.b16 %v755, %v754
      %v762 = vunpack.c.l.b16 %v746
      %v763 = vunpack.c.l.b16 %v747
      %v764 = vpack.c.b16 %v763, %v762
      %v767 = vsel %vm439, %v756, 0
      %v770 = vsel %vm439, %v757, 0
      %v773 = vsel %vm439, %v758, 0
      %v776 = vsel %vm439, %v759, 0
      %778 = vmatpush.bf16.msra.mxu0 0
      %779 = vmatpush.bf16.msra.mxu0 0
      %780 = vmatpush.bf16.msra.mxu0 0
      %781 = vmatpush.bf16.msra.mxu0 0
      %782 = vmatpush.bf16.msra.mxu0 0
      %783 = vmatpush.bf16.msra.mxu0 0
      %784 = vmatpush.bf16.msra.mxu0 0
      %785 = vmatpush.bf16.msra.mxu0 %v764
      %786 = vmatmul.bf16.gmra.mxu0 %v767
      %v787 = vpop.f32.mrf.mxu0
      %v788 = vadd.f32 0.0, %v787
      %v789 = vpop.f32.mrf.mxu0
      %v790 = vadd.f32 0.0, %v789
      %791 = vmatmul.bf16.gmra.mxu0 %v770
      %v792 = vpop.f32.mrf.mxu0
      %v793 = vadd.f32 0.0, %v792
      %v794 = vpop.f32.mrf.mxu0
      %v795 = vadd.f32 0.0, %v794
      %796 = vmatmul.bf16.gmra.mxu0 %v773
      %v797 = vpop.f32.mrf.mxu0
      %v798 = vadd.f32 0.0, %v797
      %v799 = vpop.f32.mrf.mxu0
      %v800 = vadd.f32 0.0, %v799
      %801 = vmatmul.bf16.gmra.mxu0 %v776
      %v802 = vpop.f32.mrf.mxu0
      %v803 = vadd.f32 0.0, %v802
      %v804 = vpop.f32.mrf.mxu0
      %v805 = vadd.f32 0.0, %v804
      %806 = vdwg.mxu0
      %v807 = vadd.f32 %v683, %v788
      %v808 = vadd.f32 %v685, %v790
      %v809 = vadd.f32 %v688, %v793
      %v810 = vadd.f32 %v690, %v795
      %v811 = vadd.f32 %v693, %v798
      %v812 = vadd.f32 %v695, %v800
      %v813 = vadd.f32 %v698, %v803
      %v814 = vadd.f32 %v700, %v805
      %v815 = vld [vmem:[%s4] sm:$0x1]
      %v817 = vperm.slane %v815, 0
      %v819 = vadd.f32 %v807, %v817
      %v820 = vadd.f32 %v808, %v817
      %v821 = vadd.f32 %v809, %v817
      %v822 = vadd.f32 %v810, %v817
      %v823 = vadd.f32 %v811, %v817
      %v824 = vadd.f32 %v812, %v817
      %v825 = vadd.f32 %v813, %v817
      %v826 = vadd.f32 %v814, %v817
      %v827 = vmax.f32 %v819, 0.0
      %v828 = vmax.f32 %v820, 0.0
      %v829 = vmax.f32 %v821, 0.0
      %v830 = vmax.f32 %v822, 0.0
      %v831 = vmax.f32 %v823, 0.0
      %v832 = vmax.f32 %v824, 0.0
      %v833 = vmax.f32 %v825, 0.0
      %v834 = vmax.f32 %v826, 0.0
      %vm835 = vcmp.lt.s32.totalorder %v300, 6
      %v836 = vsel %vm835, 1, 0
      %vm837 = vcmp.eq.s32.totalorder %v836, 1
      %v838 = vsel %vm837, %v827, 0.0
      %v839 = vsel %vm837, %v828, 0.0
      %v840 = vsel %vm837, %v829, 0.0
      %v841 = vsel %vm837, %v830, 0.0
      %v842 = vsel %vm837, %v831, 0.0
      %v843 = vsel %vm837, %v832, 0.0
      %v844 = vsel %vm837, %v833, 0.0
      %v845 = vsel %vm837, %v834, 0.0
      %v846 = vrot.slane %v838, 4
      %v847 = vmax.f32 %v838, %v846
      %v848 = vrot.slane %v847, 2
      %v849 = vmax.f32 %v847, %v848
      %v850 = vrot.slane %v849, 1
      %v851 = vmax.f32 %v849, %v850
      %v852 = vrot.slane %v839, 4
      %v853 = vmax.f32 %v839, %v852
      %v854 = vrot.slane %v853, 2
      %v855 = vmax.f32 %v853, %v854
      %v856 = vrot.slane %v855, 1
      %v857 = vmax.f32 %v855, %v856
      %v858 = vrot.slane %v840, 4
      %v859 = vmax.f32 %v840, %v858
      %v860 = vrot.slane %v859, 2
      %v861 = vmax.f32 %v859, %v860
      %v862 = vrot.slane %v861, 1
      %v863 = vmax.f32 %v861, %v862
      %v864 = vrot.slane %v841, 4
      %v865 = vmax.f32 %v841, %v864
      %v866 = vrot.slane %v865, 2
      %v867 = vmax.f32 %v865, %v866
      %v868 = vrot.slane %v867, 1
      %v869 = vmax.f32 %v867, %v868
      %v870 = vrot.slane %v842, 4
      %v871 = vmax.f32 %v842, %v870
      %v872 = vrot.slane %v871, 2
      %v873 = vmax.f32 %v871, %v872
      %v874 = vrot.slane %v873, 1
      %v875 = vmax.f32 %v873, %v874
      %v876 = vrot.slane %v843, 4
      %v877 = vmax.f32 %v843, %v876
      %v878 = vrot.slane %v877, 2
      %v879 = vmax.f32 %v877, %v878
      %v880 = vrot.slane %v879, 1
      %v881 = vmax.f32 %v879, %v880
      %v882 = vrot.slane %v844, 4
      %v883 = vmax.f32 %v844, %v882
      %v884 = vrot.slane %v883, 2
      %v885 = vmax.f32 %v883, %v884
      %v886 = vrot.slane %v885, 1
      %v887 = vmax.f32 %v885, %v886
      %v888 = vrot.slane %v845, 4
      %v889 = vmax.f32 %v845, %v888
      %v890 = vrot.slane %v889, 2
      %v891 = vmax.f32 %v889, %v890
      %v892 = vrot.slane %v891, 1
      %v893 = vmax.f32 %v891, %v892
      %vm902 = vcmask 1041409
      %v903 = vsel %vm902, %v590, %v584
      %vm904 = vcmask 1042434
      %v905 = vsel %vm904, %v596, %v903
      %vm906 = vcmask 1043459
      %v907 = vsel %vm906, %v602, %v905
      %vm908 = vcmask 1044484
      %v909 = vsel %vm908, %v608, %v907
      %vm910 = vcmask 1045509
      %v911 = vsel %vm910, %v614, %v909
      %vm912 = vcmask 1046534
      %v913 = vsel %vm912, %v620, %v911
      %vm914 = vcmask 1047559
      %v915 = vsel %vm914, %v626, %v913
      %v925 = vsel %vm902, %v857, %v851
      %v926 = vsel %vm904, %v863, %v925
      %v927 = vsel %vm906, %v869, %v926
      %v928 = vsel %vm908, %v875, %v927
      %v929 = vsel %vm910, %v881, %v928
      %v930 = vsel %vm912, %v887, %v929
      %v931 = vsel %vm914, %v893, %v930
      %v933 = vld [vmem:[%s5] sm:$0xff]
      %v934 = vld [vmem:[%s5 + $0x8] sm:$0xff]
      %v935 = vld [vmem:[%s5 + $0x10] sm:$0xff]
      %v936 = vld [vmem:[%s5 + $0x18] sm:$0xff]
      %v937 = vld [vmem:[%s5 + $0x20] sm:$0xff]
      %v938 = vld [vmem:[%s5 + $0x28] sm:$0xff]
      %v939 = vld [vmem:[%s5 + $0x30] sm:$0xff]
      %v940 = vld [vmem:[%s5 + $0x38] sm:$0xff]
      %v941 = vld [vmem:[%s5 + $0x40] sm:$0xff]
      %v942 = vld [vmem:[%s5 + $0x48] sm:$0xff]
      %v943 = vld [vmem:[%s5 + $0x50] sm:$0xff]
      %v944 = vld [vmem:[%s5 + $0x58] sm:$0xff]
      %v945 = vld [vmem:[%s5 + $0x60] sm:$0xff]
      %v946 = vld [vmem:[%s5 + $0x68] sm:$0xff]
      %v947 = vld [vmem:[%s5 + $0x70] sm:$0xff]
      %v948 = vld [vmem:[%s5 + $0x78] sm:$0xff]
      %v949 = vld [vmem:[%s5 + $0x80] sm:$0xff]
      %v950 = vld [vmem:[%s5 + $0x88] sm:$0xff]
      %v951 = vld [vmem:[%s5 + $0x90] sm:$0xff]
      %v952 = vld [vmem:[%s5 + $0x98] sm:$0xff]
      %v953 = vld [vmem:[%s5 + $0xa0] sm:$0xff]
      %v954 = vld [vmem:[%s5 + $0xa8] sm:$0xff]
      %v955 = vld [vmem:[%s5 + $0xb0] sm:$0xff]
      %v956 = vld [vmem:[%s5 + $0xb8] sm:$0xff]
      %v957 = vld [vmem:[%s5 + $0xc0] sm:$0xff]
      %v958 = vld [vmem:[%s5 + $0xc8] sm:$0xff]
      %v959 = vld [vmem:[%s5 + $0xd0] sm:$0xff]
      %v960 = vld [vmem:[%s5 + $0xd8] sm:$0xff]
      %v961 = vld [vmem:[%s5 + $0xe0] sm:$0xff]
      %v962 = vld [vmem:[%s5 + $0xe8] sm:$0xff]
      %v963 = vld [vmem:[%s5 + $0xf0] sm:$0xff]
      %v964 = vld [vmem:[%s5 + $0xf8] sm:$0xff]
      %v965 = vld [vmem:[%s6] sm:$0x1]
      %v967 = vperm.slane %v965, 0
      %969 = vmatpush.msra.mxu0 %v948
      %970 = vmatpush.msra.mxu0 %v947
      %971 = vmatpush.msra.mxu0 %v946
      %972 = vmatpush.msra.mxu0 %v945
      %973 = vmatpush.msra.mxu0 %v944
      %974 = vmatpush.msra.mxu0 %v943
      %975 = vmatpush.msra.mxu0 %v942
      %976 = vmatpush.msra.mxu0 %v941
      %977 = vmatpush.msra.mxu0 %v940
      %978 = vmatpush.msra.mxu0 %v939
      %979 = vmatpush.msra.mxu0 %v938
      %980 = vmatpush.msra.mxu0 %v937
      %981 = vmatpush.msra.mxu0 %v936
      %982 = vmatpush.msra.mxu0 %v935
      %983 = vmatpush.msra.mxu0 %v934
      %984 = vmatpush.msra.mxu0 %v933
      %985 = vmatmul.f32.gmra.mxu0 %v915
      %v986 = vpop.f32.mrf.mxu0
      %v987 = vadd.f32 %v967, %v986
      %988 = vdwg.mxu0
      %989 = vmatpush.msra.mxu0 %v964
      %990 = vmatpush.msra.mxu0 %v963
      %991 = vmatpush.msra.mxu0 %v962
      %992 = vmatpush.msra.mxu0 %v961
      %993 = vmatpush.msra.mxu0 %v960
      %994 = vmatpush.msra.mxu0 %v959
      %995 = vmatpush.msra.mxu0 %v958
      %996 = vmatpush.msra.mxu0 %v957
      %997 = vmatpush.msra.mxu0 %v956
      %998 = vmatpush.msra.mxu0 %v955
      %999 = vmatpush.msra.mxu0 %v954
      %1000 = vmatpush.msra.mxu0 %v953
      %1001 = vmatpush.msra.mxu0 %v952
      %1002 = vmatpush.msra.mxu0 %v951
      %1003 = vmatpush.msra.mxu0 %v950
      %1004 = vmatpush.msra.mxu0 %v949
      %1005 = vmatmul.f32.gmra.mxu0 %v931
      %v1006 = vpop.f32.mrf.mxu0
      %v1007 = vadd.f32 %v987, %v1006
      %1008 = vdwg.mxu0
      %1009 = vst [vmem:[%s281] sm:$0xff] %v1007
      %p1010 = scmp.lt.s32.totalorder %s18, 1
      %s1011 = scalar_select %p1010, %s18, 1
      %s1012 = smul.addr %s1011, 8
      %s1013 = scalar_lea.vmem %s7, %s1012
      // Predicated region
      $region49: #{forward.1} parent=47 // pred_check
        %p1014 = pneg %p188
      $region50: #{forward.1} parent=47 // pred_check_branch
        %1016 = sbr.rel (%p1014) target = $region52
      $region51: #{forward.1} parent=47 // pred_region
        _
      $region52: #{forward.1} parent=47 // pred_fallthru
        _
    $region48: #{forward.1} parent=5 // pred_fallthru
      _
    %p1017 = scmp.le.s32.totalorder 2, %s13
    // Predicated region
    $region53: #{forward.1} parent=5 // pred_check
      %p1018 = pneg %p1017
    $region54: #{forward.1} parent=5 // pred_check_branch
      %1020 = sbr.rel (%p1018) target = $region56
    $region55: #{forward.1} parent=5 // pred_region
      %s1021 = ssub.s32 %s13, 2
      // Predicated region
      $region57: #{forward.1} parent=55 // pred_check
        %p1022 = pneg %p194
      $region58: #{forward.1} parent=55 // pred_check_branch
        %1024 = sbr.rel (%p1022) target = $region60
      $region59: #{forward.1} parent=55 // pred_region
        %p1025 = scmp.lt.s32.totalorder %s19, 1
        %s1026 = scalar_select %p1025, %s19, 1
        %s1027 = smul.addr %s1026, 8
        %s1028 = scalar_lea.vmem %s7, %s1027
      $region60: #{forward.1} parent=55 // pred_fallthru
        _
    $region56: #{forward.1} parent=5 // pred_fallthru
      _
  $region6: #{forward.1} parent=0 // loop_footer
    %s17 = sadd.s32 1, %s13
  $region7: #{forward.1} parent=0 // loop_footer_branch
    %12 = sbr.rel target = $region3
  $region8: #{forward.1} parent=0 // loop_exit
    _

</llo_original>
